<compile_context>
chip_gen: v6e
topology: v6e:2x2x1
jax: 0.10.0
libtpu: 0.0.40
codegen_flags: <defaults>
</compile_context>

<pallas_src>
import jax
import jax.numpy as jnp
from jax import lax
from jax.experimental import pallas as pl
from jax.experimental.pallas import tpu as pltpu


def _silu(y):
    return y * jax.nn.sigmoid(y)


# -----------------------------------------------------------------------------
# Fused MP kernel: one grid step per (batch image, row-pair block).
#   xb_ref : (1, Tb, 2, Wo, 2C)  column/row-paired NHWC block
#            xb[0, i, p, j, q*C + c] == x[c, 2*(i0+i)+p, 2j+q]
#   xh_ref : (1, 1, 1, Wo, 2C)   halo = odd row of row-pair i0-1 (garbage at rb==0,
#                                masked to zero inside the kernel = top padding)
#   o_ref  : (1, Tb, Wo, 2c_)    channels = [conv2_2 branch, maxpool branch]
# -----------------------------------------------------------------------------
def _mp_kernel(xb_ref, xh_ref, w12_ref, b12_ref, w21_ref, b21_ref,
               w22_ref, b22_ref, o_ref):
    _, Tb, _, Wo, C2 = xb_ref.shape
    C = C2 // 2
    c_ = b22_ref.shape[1]
    R = Tb * Wo
    first_rblock = pl.program_id(1) == 0

    xb = xb_ref[0]                                    # (Tb, 2, Wo, 2C) bf16
    xe = xb[:, 0]                                     # even rows  (Tb, Wo, 2C)
    xo = xb[:, 1]                                     # odd rows   (Tb, Wo, 2C)

    # ---------------- Branch 1: MaxPool2d(2,2) + 1x1 conv + SiLU ----------------
    rowmax = jnp.maximum(xe, xo)                      # max over row pair (exact in bf16)
    pooled = jnp.maximum(rowmax[..., :C], rowmax[..., C:])       # (Tb, Wo, C)
    y1 = jnp.dot(pooled.reshape(R, C), w12_ref[...],
                 preferred_element_type=jnp.float32) + b12_ref[...]
    y1 = _silu(y1)                                    # (R, c_) f32

    # -------- Branch 2 stage 1: 1x1 conv + SiLU on even / odd column halves -----
    def stage1(flat):                                 # (rows, 2C) bf16 -> two (rows, c_) f32
        ev = jnp.dot(flat[:, :C], w21_ref[...], preferred_element_type=jnp.float32)
        od = jnp.dot(flat[:, C:], w21_ref[...], preferred_element_type=jnp.float32)
        return _silu(ev + b21_ref[...]), _silu(od + b21_ref[...])

    te_e, te_o = stage1(xe.reshape(R, C2))            # even row of each pair

    halo = xh_ref[0, 0, 0]                            # (Wo, 2C) odd row of pair i0-1
    xo_ext = jnp.concatenate([halo, xo.reshape(R, C2)], axis=0)   # ((Tb+1)*Wo, 2C)
    to_e, to_o = stage1(xo_ext)                       # ((Tb+1)*Wo, c_) each, f32

    # Top zero padding of conv2_2: halo row is zero for the first row block.
    ext_rows = (Tb + 1) * Wo
    top = lax.broadcasted_iota(jnp.int32, (ext_rows, c_), 0) < Wo
    kill_top = jnp.logical_and(first_rblock, top)
    to_e = jnp.where(kill_top, 0.0, to_e)
    to_o = jnp.where(kill_top, 0.0, to_o)

    cur_e, cur_o = to_e[Wo:], to_o[Wo:]               # odd row of pair i     (kh=2)
    prv_e, prv_o = to_e[:R], to_o[:R]                 # odd row of pair i-1   (kh=0)

    # --------- Branch 2 stage 2: 3x3 stride-2 pad-1 conv as 9 K=c_ matmuls ------
    def mm(a, w):                                     # bf16 operands, f32 accumulate
        return jnp.dot(a.astype(jnp.bfloat16), w, preferred_element_type=jnp.float32)

    # taps on columns 2j (kw=1) and 2j+1 (kw=2)
    acc = mm(te_e, w22_ref[1, 1])
    acc = acc + mm(te_o, w22_ref[1, 2])
    acc = acc + mm(cur_e, w22_ref[2, 1])
    acc = acc + mm(cur_o, w22_ref[2, 2])
    acc = acc + mm(prv_e, w22_ref[0, 1])
    acc = acc + mm(prv_o, w22_ref[0, 2])

    # taps on column 2j-1 (kw=0): compute per-pixel partial sums on the odd-column
    # halves, then shift them one column pair to the right; a zero enters at j == 0
    # (the conv's left padding).  Value-level shift, no scratch / padded buffer.
    s = mm(te_o, w22_ref[1, 0])
    s = s + mm(cur_o, w22_ref[2, 0])
    s = s + mm(prv_o, w22_ref[0, 0])
    s = jnp.concatenate([jnp.zeros((1, c_), jnp.float32), s[:R - 1]], axis=0)
    col_idx = lax.broadcasted_iota(jnp.int32, (R, c_), 0) % Wo
    acc = acc + jnp.where(col_idx == 0, 0.0, s)

    y2 = _silu(acc + b22_ref[...])                    # (R, c_) f32

    # torch.cat((x2, x1), dim=1): branch-2 channels first, branch-1 second.
    o_ref[0, :, :, :c_] = y2.reshape(Tb, Wo, c_).astype(o_ref.dtype)
    o_ref[0, :, :, c_:] = y1.reshape(Tb, Wo, c_).astype(o_ref.dtype)


def _pick_block_rows(ho, target=8):
    best = 1
    for t in range(1, min(ho, target) + 1):
        if ho % t == 0:
            best = t
    return best


def mp_forward(x_nchw, params, block_rows=None):
    N, C, H, W = x_nchw.shape
    assert C % 2 == 0 and H % 2 == 0 and W % 2 == 0
    c_ = C // 2
    Ho, Wo = H // 2, W // 2
    Tb = _pick_block_rows(Ho) if block_rows is None else block_rows
    assert Ho % Tb == 0, (Ho, Tb)

    # Single input relayout: NCHW -> column/row-paired NHWC (N, Ho, 2, Wo, 2C), bf16.
    xb16 = x_nchw.astype(jnp.bfloat16)
    xp = jnp.transpose(xb16.reshape(N, C, Ho, 2, Wo, 2), (0, 2, 3, 4, 5, 1))
    xp = xp.reshape(N, Ho, 2, Wo, 2 * C)

    bf = jnp.bfloat16
    w12 = params["w12"].astype(bf)
    w21 = params["w21"].astype(bf)
    w22 = params["w22"].astype(bf)

    out = pl.pallas_call(
        _mp_kernel,
        out_shape=jax.ShapeDtypeStruct((N, Ho, Wo, C), x_nchw.dtype),
        grid=(N, Ho // Tb),
        in_specs=[
            pl.BlockSpec((1, Tb, 2, Wo, 2 * C), lambda n, r: (n, r, 0, 0, 0)),
            # one-row halo: odd row of the row pair just above this block
            pl.BlockSpec((1, 1, 1, Wo, 2 * C),
                         lambda n, r: (n, jnp.maximum(r * Tb - 1, 0), 1, 0, 0)),
            pl.BlockSpec((C, c_), lambda n, r: (0, 0)),
            pl.BlockSpec((1, c_), lambda n, r: (0, 0)),
            pl.BlockSpec((C, c_), lambda n, r: (0, 0)),
            pl.BlockSpec((1, c_), lambda n, r: (0, 0)),
            pl.BlockSpec((3, 3, c_, c_), lambda n, r: (0, 0, 0, 0)),
            pl.BlockSpec((1, c_), lambda n, r: (0, 0)),
        ],
        out_specs=pl.BlockSpec((1, Tb, Wo, C), lambda n, r: (n, r, 0, 0)),
        compiler_params=pltpu.CompilerParams(
            dimension_semantics=("parallel", "parallel"),
            vmem_limit_bytes=64 * 1024 * 1024),
    )(xp, xp, w12, params["b12"], w21, params["b21"], w22, params["b22"])

    return jnp.transpose(out, (0, 3, 1, 2))     # NHWC -> NCHW


# -----------------------------------------------------------------------------
# Parameter init (deterministic): Conv2d(bias=False) + BatchNorm2d folded for
# inference.
# -----------------------------------------------------------------------------
def _init_conv_bn(key, cin, cout, k=1, eps=1e-5):
    kw, kg, kb, km, kv = jax.random.split(key, 5)
    fan_in = cin * k * k
    if k == 1:
        w = jax.random.normal(kw, (cin, cout), jnp.float32) / jnp.sqrt(fan_in)
    else:
        w = jax.random.normal(kw, (k, k, cin, cout), jnp.float32) / jnp.sqrt(fan_in)
    gamma = 1.0 + 0.1 * jax.random.normal(kg, (cout,), jnp.float32)
    beta = 0.1 * jax.random.normal(kb, (cout,), jnp.float32)
    mean = 0.1 * jax.random.normal(km, (cout,), jnp.float32)
    var = 1.0 + jnp.abs(jax.random.normal(kv, (cout,), jnp.float32))
    scale = gamma / jnp.sqrt(var + eps)
    return w * scale, (beta - mean * scale).reshape(1, cout)


def init_mp_params(key, c_in):
    c_ = c_in // 2
    k1, k2, k3 = jax.random.split(key, 3)
    w12, b12 = _init_conv_bn(k1, c_in, c_, k=1)      # conv1_2 (after maxpool)
    w21, b21 = _init_conv_bn(k2, c_in, c_, k=1)      # conv2_1
    w22, b22 = _init_conv_bn(k3, c_, c_, k=3)        # conv2_2 (3x3, stride 2)
    return {"w12": w12, "b12": b12, "w21": w21, "b21": b21,
            "w22": w22, "b22": b22}


# -----------------------------------------------------------------------------
# Pure-JAX reference (correctness check).  Matmul operands are cast to bf16 to
# mirror the kernel's MXU input precision (accumulation stays f32).
# -----------------------------------------------------------------------------
def mp_reference(x_nchw, p):
    N, C, H, W = x_nchw.shape
    c_ = C // 2
    Ho, Wo = H // 2, W // 2
    bf, f32 = jnp.bfloat16, jnp.float32

    def mm(a, w):
        return jnp.einsum('nhwc,cd->nhwd', a.astype(bf), w.astype(bf),
                          preferred_element_type=f32)

    x = jnp.transpose(x_nchw, (0, 2, 3, 1)).astype(bf).astype(f32)
    # branch 1
    xm = jnp.max(x.reshape(N, Ho, 2, Wo, 2, C), axis=(2, 4))
    y1 = _silu(mm(xm, p["w12"]) + p["b12"][0])
    # branch 2
    t = _silu(mm(x, p["w21"]) + p["b21"][0])
    tpad = jnp.pad(t, ((0, 0), (1, 1), (1, 1), (0, 0)))
    acc = jnp.zeros((N, Ho, Wo, c_), f32)
    for kh in range(3):
        for kw in range(3):
            patch = tpad[:, kh:kh + 2 * Ho:2, kw:kw + 2 * Wo:2, :]
            acc = acc + mm(patch, p["w22"][kh, kw])
    y2 = _silu(acc + p["b22"][0])
    out = jnp.concatenate([y2, y1], axis=-1)
    return jnp.transpose(out, (0, 3, 1, 2))


if __name__ == "__main__":
    key = jax.random.PRNGKey(0)
    kx, kp = jax.random.split(key)

    N, C, H, W = 2, 8, 16, 16                    # c_ = 4, Ho = Wo = 8
    x = jax.random.normal(kx, (N, C, H, W), jnp.float32)
    params = init_mp_params(kp, C)

    # block_rows=4 -> 2 row blocks per image: exercises both the zero top-padding
    # path (rb == 0) and the recomputed-halo path (rb > 0).
    fwd = jax.jit(lambda xx, pp: mp_forward(xx, pp, block_rows=4))
    out = jax.block_until_ready(fwd(x, params))

    assert out.shape == (N, C, H // 2, W // 2), out.shape
    assert bool(jnp.all(jnp.isfinite(out)))

    ref = mp_reference(x, params)
    err = float(jnp.max(jnp.abs(out - ref)))
    assert err < 2e-2, f"max abs err vs reference: {err}"
    print("KERNEL_OK")
</pallas_src>

<mosaic_0001>
module attributes {stable_mosaic.version = 11 : i64} {
  func.func @_mp_kernel(%arg0: i32, %arg1: i32, %arg2: memref<1x4x2x8x16xbf16, #tpu.memory_space<vmem>>, %arg3: memref<1x1x1x8x16xbf16, #tpu.memory_space<vmem>>, %arg4: memref<8x4xbf16, #tpu.memory_space<vmem>>, %arg5: memref<1x4xf32, #tpu.memory_space<vmem>>, %arg6: memref<8x4xbf16, #tpu.memory_space<vmem>>, %arg7: memref<1x4xf32, #tpu.memory_space<vmem>>, %arg8: memref<3x3x4x4xbf16, #tpu.memory_space<vmem>>, %arg9: memref<1x4xf32, #tpu.memory_space<vmem>>, %arg10: memref<1x4x8x8xf32, #tpu.memory_space<vmem>>) attributes {dimension_semantics = [#tpu.dimension_semantics<parallel>, #tpu.dimension_semantics<parallel>], iteration_bounds = array<i64: 2, 2>, scalar_prefetch = 0 : i64, scratch_operands = 0 : i64, tpu.core_type = #tpu.core_type<tc>, window_params = [{transform_indices = @transform_0, window_bounds = array<i64: 1, 4, 2, 8, 16>}, {transform_indices = @transform_1, window_bounds = array<i64: 1, 1, 1, 8, 16>}, {pipeline_mode = #tpu.pipeline_mode<synchronous>, transform_indices = @transform_2, window_bounds = array<i64: 8, 4>}, {pipeline_mode = #tpu.pipeline_mode<synchronous>, transform_indices = @transform_3, window_bounds = array<i64: 1, 4>}, {pipeline_mode = #tpu.pipeline_mode<synchronous>, transform_indices = @transform_4, window_bounds = array<i64: 8, 4>}, {pipeline_mode = #tpu.pipeline_mode<synchronous>, transform_indices = @transform_5, window_bounds = array<i64: 1, 4>}, {pipeline_mode = #tpu.pipeline_mode<synchronous>, transform_indices = @transform_6, window_bounds = array<i64: 3, 3, 4, 4>}, {pipeline_mode = #tpu.pipeline_mode<synchronous>, transform_indices = @transform_7, window_bounds = array<i64: 1, 4>}, {transform_indices = @transform_8, window_bounds = array<i64: 1, 4, 8, 8>}]} {
    %c0_i32 = arith.constant 0 : i32
    %0 = arith.cmpi eq, %arg1, %c0_i32 : i32
    %c0 = arith.constant 0 : index
    %c0_0 = arith.constant 0 : index
    %c0_1 = arith.constant 0 : index
    %c0_2 = arith.constant 0 : index
    %c0_3 = arith.constant 0 : index
    %1 = vector.load %arg2[%c0, %c0_0, %c0_1, %c0_2, %c0_3] : memref<1x4x2x8x16xbf16, #tpu.memory_space<vmem>>, vector<1x4x2x8x16xbf16>
    %2 = vector.shape_cast %1 : vector<1x4x2x8x16xbf16> to vector<4x2x8x16xbf16>
    %3 = vector.extract_strided_slice %2 {offsets = [0, 0, 0, 0], sizes = [4, 1, 8, 16], strides = [1, 1, 1, 1]} : vector<4x2x8x16xbf16> to vector<4x1x8x16xbf16>
    %4 = vector.shape_cast %3 : vector<4x1x8x16xbf16> to vector<4x8x16xbf16>
    %5 = vector.extract_strided_slice %2 {offsets = [0, 1, 0, 0], sizes = [4, 1, 8, 16], strides = [1, 1, 1, 1]} : vector<4x2x8x16xbf16> to vector<4x1x8x16xbf16>
    %6 = vector.shape_cast %5 : vector<4x1x8x16xbf16> to vector<4x8x16xbf16>
    %7 = arith.maximumf %4, %6 : vector<4x8x16xbf16>
    %8 = vector.extract_strided_slice %7 {offsets = [0, 0, 0], sizes = [4, 8, 8], strides = [1, 1, 1]} : vector<4x8x16xbf16> to vector<4x8x8xbf16>
    %9 = vector.extract_strided_slice %7 {offsets = [0, 0, 8], sizes = [4, 8, 8], strides = [1, 1, 1]} : vector<4x8x16xbf16> to vector<4x8x8xbf16>
    %10 = arith.maximumf %8, %9 : vector<4x8x8xbf16>
    %11 = vector.shape_cast %10 : vector<4x8x8xbf16> to vector<32x8xbf16>
    %c0_4 = arith.constant 0 : index
    %c0_5 = arith.constant 0 : index
    %12 = vector.load %arg4[%c0_4, %c0_5] : memref<8x4xbf16, #tpu.memory_space<vmem>>, vector<8x4xbf16>
    %cst = arith.constant dense<0.000000e+00> : vector<32x4xf32>
    %13 = tpu.matmul %11, %12, %cst {dimension_numbers = #tpu.dot_dimension_numbers<[1], [0], [0], [1], [0, 0, 1, 1], [], []>} : vector<32x8xbf16>, vector<8x4xbf16>, vector<32x4xf32> -> vector<32x4xf32>
    %c0_6 = arith.constant 0 : index
    %c0_7 = arith.constant 0 : index
    %14 = vector.load %arg5[%c0_6, %c0_7] : memref<1x4xf32, #tpu.memory_space<vmem>>, vector<1x4xf32>
    %15 = vector.broadcast %14 : vector<1x4xf32> to vector<32x4xf32>
    %16 = arith.addf %13, %15 : vector<32x4xf32>
    %17 = arith.negf %16 : vector<32x4xf32>
    %18 = math.exp %17 : vector<32x4xf32>
    %cst_8 = arith.constant 1.000000e+00 : f32
    %19 = vector.broadcast %cst_8 : f32 to vector<32x4xf32>
    %20 = arith.addf %19, %18 : vector<32x4xf32>
    %21 = arith.divf %19, %20 : vector<32x4xf32>
    %22 = arith.mulf %16, %21 : vector<32x4xf32>
    %23 = vector.shape_cast %4 : vector<4x8x16xbf16> to vector<32x16xbf16>
    %24 = vector.extract_strided_slice %23 {offsets = [0, 0], sizes = [32, 8], strides = [1, 1]} : vector<32x16xbf16> to vector<32x8xbf16>
    %c0_9 = arith.constant 0 : index
    %c0_10 = arith.constant 0 : index
    %25 = vector.load %arg6[%c0_9, %c0_10] : memref<8x4xbf16, #tpu.memory_space<vmem>>, vector<8x4xbf16>
    %cst_11 = arith.constant dense<0.000000e+00> : vector<32x4xf32>
    %26 = tpu.matmul %24, %25, %cst_11 {dimension_numbers = #tpu.dot_dimension_numbers<[1], [0], [0], [1], [0, 0, 1, 1], [], []>} : vector<32x8xbf16>, vector<8x4xbf16>, vector<32x4xf32> -> vector<32x4xf32>
    %27 = vector.extract_strided_slice %23 {offsets = [0, 8], sizes = [32, 8], strides = [1, 1]} : vector<32x16xbf16> to vector<32x8xbf16>
    %c0_12 = arith.constant 0 : index
    %c0_13 = arith.constant 0 : index
    %28 = vector.load %arg6[%c0_12, %c0_13] : memref<8x4xbf16, #tpu.memory_space<vmem>>, vector<8x4xbf16>
    %cst_14 = arith.constant dense<0.000000e+00> : vector<32x4xf32>
    %29 = tpu.matmul %27, %28, %cst_14 {dimension_numbers = #tpu.dot_dimension_numbers<[1], [0], [0], [1], [0, 0, 1, 1], [], []>} : vector<32x8xbf16>, vector<8x4xbf16>, vector<32x4xf32> -> vector<32x4xf32>
    %c0_15 = arith.constant 0 : index
    %c0_16 = arith.constant 0 : index
    %30 = vector.load %arg7[%c0_15, %c0_16] : memref<1x4xf32, #tpu.memory_space<vmem>>, vector<1x4xf32>
    %31 = vector.broadcast %30 : vector<1x4xf32> to vector<32x4xf32>
    %32 = arith.addf %26, %31 : vector<32x4xf32>
    %33 = arith.negf %32 : vector<32x4xf32>
    %34 = math.exp %33 : vector<32x4xf32>
    %cst_17 = arith.constant 1.000000e+00 : f32
    %35 = vector.broadcast %cst_17 : f32 to vector<32x4xf32>
    %36 = arith.addf %35, %34 : vector<32x4xf32>
    %37 = arith.divf %35, %36 : vector<32x4xf32>
    %38 = arith.mulf %32, %37 : vector<32x4xf32>
    %c0_18 = arith.constant 0 : index
    %c0_19 = arith.constant 0 : index
    %39 = vector.load %arg7[%c0_18, %c0_19] : memref<1x4xf32, #tpu.memory_space<vmem>>, vector<1x4xf32>
    %40 = vector.broadcast %39 : vector<1x4xf32> to vector<32x4xf32>
    %41 = arith.addf %29, %40 : vector<32x4xf32>
    %42 = arith.negf %41 : vector<32x4xf32>
    %43 = math.exp %42 : vector<32x4xf32>
    %cst_20 = arith.constant 1.000000e+00 : f32
    %44 = vector.broadcast %cst_20 : f32 to vector<32x4xf32>
    %45 = arith.addf %44, %43 : vector<32x4xf32>
    %46 = arith.divf %44, %45 : vector<32x4xf32>
    %47 = arith.mulf %41, %46 : vector<32x4xf32>
    %c0_21 = arith.constant 0 : index
    %c0_22 = arith.constant 0 : index
    %c0_23 = arith.constant 0 : index
    %c0_24 = arith.constant 0 : index
    %c0_25 = arith.constant 0 : index
    %48 = vector.load %arg3[%c0_21, %c0_22, %c0_23, %c0_24, %c0_25] : memref<1x1x1x8x16xbf16, #tpu.memory_space<vmem>>, vector<1x1x1x8x16xbf16>
    %49 = vector.shape_cast %48 : vector<1x1x1x8x16xbf16> to vector<8x16xbf16>
    %50 = vector.shape_cast %6 : vector<4x8x16xbf16> to vector<32x16xbf16>
    %51 = tpu.concatenate %49, %50 in 0 : vector<8x16xbf16>, vector<32x16xbf16> -> vector<40x16xbf16>
    %52 = vector.extract_strided_slice %51 {offsets = [0, 0], sizes = [40, 8], strides = [1, 1]} : vector<40x16xbf16> to vector<40x8xbf16>
    %c0_26 = arith.constant 0 : index
    %c0_27 = arith.constant 0 : index
    %53 = vector.load %arg6[%c0_26, %c0_27] : memref<8x4xbf16, #tpu.memory_space<vmem>>, vector<8x4xbf16>
    %cst_28 = arith.constant dense<0.000000e+00> : vector<40x4xf32>
    %54 = tpu.matmul %52, %53, %cst_28 {dimension_numbers = #tpu.dot_dimension_numbers<[1], [0], [0], [1], [0, 0, 1, 1], [], []>} : vector<40x8xbf16>, vector<8x4xbf16>, vector<40x4xf32> -> vector<40x4xf32>
    %55 = vector.extract_strided_slice %51 {offsets = [0, 8], sizes = [40, 8], strides = [1, 1]} : vector<40x16xbf16> to vector<40x8xbf16>
    %c0_29 = arith.constant 0 : index
    %c0_30 = arith.constant 0 : index
    %56 = vector.load %arg6[%c0_29, %c0_30] : memref<8x4xbf16, #tpu.memory_space<vmem>>, vector<8x4xbf16>
    %cst_31 = arith.constant dense<0.000000e+00> : vector<40x4xf32>
    %57 = tpu.matmul %55, %56, %cst_31 {dimension_numbers = #tpu.dot_dimension_numbers<[1], [0], [0], [1], [0, 0, 1, 1], [], []>} : vector<40x8xbf16>, vector<8x4xbf16>, vector<40x4xf32> -> vector<40x4xf32>
    %c0_32 = arith.constant 0 : index
    %c0_33 = arith.constant 0 : index
    %58 = vector.load %arg7[%c0_32, %c0_33] : memref<1x4xf32, #tpu.memory_space<vmem>>, vector<1x4xf32>
    %59 = vector.broadcast %58 : vector<1x4xf32> to vector<40x4xf32>
    %60 = arith.addf %54, %59 : vector<40x4xf32>
    %61 = arith.negf %60 : vector<40x4xf32>
    %62 = math.exp %61 : vector<40x4xf32>
    %cst_34 = arith.constant 1.000000e+00 : f32
    %63 = vector.broadcast %cst_34 : f32 to vector<40x4xf32>
    %64 = arith.addf %63, %62 : vector<40x4xf32>
    %65 = arith.divf %63, %64 : vector<40x4xf32>
    %66 = arith.mulf %60, %65 : vector<40x4xf32>
    %c0_35 = arith.constant 0 : index
    %c0_36 = arith.constant 0 : index
    %67 = vector.load %arg7[%c0_35, %c0_36] : memref<1x4xf32, #tpu.memory_space<vmem>>, vector<1x4xf32>
    %68 = vector.broadcast %67 : vector<1x4xf32> to vector<40x4xf32>
    %69 = arith.addf %57, %68 : vector<40x4xf32>
    %70 = arith.negf %69 : vector<40x4xf32>
    %71 = math.exp %70 : vector<40x4xf32>
    %cst_37 = arith.constant 1.000000e+00 : f32
    %72 = vector.broadcast %cst_37 : f32 to vector<40x4xf32>
    %73 = arith.addf %72, %71 : vector<40x4xf32>
    %74 = arith.divf %72, %73 : vector<40x4xf32>
    %75 = arith.mulf %69, %74 : vector<40x4xf32>
    %76 = tpu.iota {dimensions = array<i32: 0>} : vector<40x4xi32>
    %c8_i32 = arith.constant 8 : i32
    %77 = vector.broadcast %c8_i32 : i32 to vector<40x4xi32>
    %78 = arith.cmpi slt, %76, %77 : vector<40x4xi32>
    %79 = vector.broadcast %0 : i1 to vector<40x4xi1>
    %80 = arith.andi %79, %78 : vector<40x4xi1>
    %cst_38 = arith.constant 0.000000e+00 : f32
    %81 = vector.broadcast %cst_38 : f32 to vector<40x4xf32>
    %82 = arith.select %80, %81, %66 : vector<40x4xi1>, vector<40x4xf32>
    %cst_39 = arith.constant 0.000000e+00 : f32
    %83 = vector.broadcast %cst_39 : f32 to vector<40x4xf32>
    %84 = arith.select %80, %83, %75 : vector<40x4xi1>, vector<40x4xf32>
    %85 = vector.extract_strided_slice %82 {offsets = [8, 0], sizes = [32, 4], strides = [1, 1]} : vector<40x4xf32> to vector<32x4xf32>
    %86 = vector.extract_strided_slice %84 {offsets = [8, 0], sizes = [32, 4], strides = [1, 1]} : vector<40x4xf32> to vector<32x4xf32>
    %87 = vector.extract_strided_slice %82 {offsets = [0, 0], sizes = [32, 4], strides = [1, 1]} : vector<40x4xf32> to vector<32x4xf32>
    %88 = vector.extract_strided_slice %84 {offsets = [0, 0], sizes = [32, 4], strides = [1, 1]} : vector<40x4xf32> to vector<32x4xf32>
    %c1 = arith.constant 1 : index
    %c1_40 = arith.constant 1 : index
    %c0_41 = arith.constant 0 : index
    %c0_42 = arith.constant 0 : index
    %89 = vector.load %arg8[%c1, %c1_40, %c0_41, %c0_42] : memref<3x3x4x4xbf16, #tpu.memory_space<vmem>>, vector<1x1x4x4xbf16>
    %90 = vector.shape_cast %89 : vector<1x1x4x4xbf16> to vector<4x4xbf16>
    %91 = arith.truncf %38 : vector<32x4xf32> to vector<32x4xbf16>
    %cst_43 = arith.constant dense<0.000000e+00> : vector<32x4xf32>
    %92 = tpu.matmul %91, %90, %cst_43 {dimension_numbers = #tpu.dot_dimension_numbers<[1], [0], [0], [1], [0, 0, 1, 1], [], []>} : vector<32x4xbf16>, vector<4x4xbf16>, vector<32x4xf32> -> vector<32x4xf32>
    %c1_44 = arith.constant 1 : index
    %c2 = arith.constant 2 : index
    %c0_45 = arith.constant 0 : index
    %c0_46 = arith.constant 0 : index
    %93 = vector.load %arg8[%c1_44, %c2, %c0_45, %c0_46] : memref<3x3x4x4xbf16, #tpu.memory_space<vmem>>, vector<1x1x4x4xbf16>
    %94 = vector.shape_cast %93 : vector<1x1x4x4xbf16> to vector<4x4xbf16>
    %95 = arith.truncf %47 : vector<32x4xf32> to vector<32x4xbf16>
    %cst_47 = arith.constant dense<0.000000e+00> : vector<32x4xf32>
    %96 = tpu.matmul %95, %94, %cst_47 {dimension_numbers = #tpu.dot_dimension_numbers<[1], [0], [0], [1], [0, 0, 1, 1], [], []>} : vector<32x4xbf16>, vector<4x4xbf16>, vector<32x4xf32> -> vector<32x4xf32>
    %97 = arith.addf %92, %96 : vector<32x4xf32>
    %c2_48 = arith.constant 2 : index
    %c1_49 = arith.constant 1 : index
    %c0_50 = arith.constant 0 : index
    %c0_51 = arith.constant 0 : index
    %98 = vector.load %arg8[%c2_48, %c1_49, %c0_50, %c0_51] : memref<3x3x4x4xbf16, #tpu.memory_space<vmem>>, vector<1x1x4x4xbf16>
    %99 = vector.shape_cast %98 : vector<1x1x4x4xbf16> to vector<4x4xbf16>
    %100 = arith.truncf %85 : vector<32x4xf32> to vector<32x4xbf16>
    %cst_52 = arith.constant dense<0.000000e+00> : vector<32x4xf32>
    %101 = tpu.matmul %100, %99, %cst_52 {dimension_numbers = #tpu.dot_dimension_numbers<[1], [0], [0], [1], [0, 0, 1, 1], [], []>} : vector<32x4xbf16>, vector<4x4xbf16>, vector<32x4xf32> -> vector<32x4xf32>
    %102 = arith.addf %97, %101 : vector<32x4xf32>
    %c2_53 = arith.constant 2 : index
    %c2_54 = arith.constant 2 : index
    %c0_55 = arith.constant 0 : index
    %c0_56 = arith.constant 0 : index
    %103 = vector.load %arg8[%c2_53, %c2_54, %c0_55, %c0_56] : memref<3x3x4x4xbf16, #tpu.memory_space<vmem>>, vector<1x1x4x4xbf16>
    %104 = vector.shape_cast %103 : vector<1x1x4x4xbf16> to vector<4x4xbf16>
    %105 = arith.truncf %86 : vector<32x4xf32> to vector<32x4xbf16>
    %cst_57 = arith.constant dense<0.000000e+00> : vector<32x4xf32>
    %106 = tpu.matmul %105, %104, %cst_57 {dimension_numbers = #tpu.dot_dimension_numbers<[1], [0], [0], [1], [0, 0, 1, 1], [], []>} : vector<32x4xbf16>, vector<4x4xbf16>, vector<32x4xf32> -> vector<32x4xf32>
    %107 = arith.addf %102, %106 : vector<32x4xf32>
    %c0_58 = arith.constant 0 : index
    %c1_59 = arith.constant 1 : index
    %c0_60 = arith.constant 0 : index
    %c0_61 = arith.constant 0 : index
    %108 = vector.load %arg8[%c0_58, %c1_59, %c0_60, %c0_61] : memref<3x3x4x4xbf16, #tpu.memory_space<vmem>>, vector<1x1x4x4xbf16>
    %109 = vector.shape_cast %108 : vector<1x1x4x4xbf16> to vector<4x4xbf16>
    %110 = arith.truncf %87 : vector<32x4xf32> to vector<32x4xbf16>
    %cst_62 = arith.constant dense<0.000000e+00> : vector<32x4xf32>
    %111 = tpu.matmul %110, %109, %cst_62 {dimension_numbers = #tpu.dot_dimension_numbers<[1], [0], [0], [1], [0, 0, 1, 1], [], []>} : vector<32x4xbf16>, vector<4x4xbf16>, vector<32x4xf32> -> vector<32x4xf32>
    %112 = arith.addf %107, %111 : vector<32x4xf32>
    %c0_63 = arith.constant 0 : index
    %c2_64 = arith.constant 2 : index
    %c0_65 = arith.constant 0 : index
    %c0_66 = arith.constant 0 : index
    %113 = vector.load %arg8[%c0_63, %c2_64, %c0_65, %c0_66] : memref<3x3x4x4xbf16, #tpu.memory_space<vmem>>, vector<1x1x4x4xbf16>
    %114 = vector.shape_cast %113 : vector<1x1x4x4xbf16> to vector<4x4xbf16>
    %115 = arith.truncf %88 : vector<32x4xf32> to vector<32x4xbf16>
    %cst_67 = arith.constant dense<0.000000e+00> : vector<32x4xf32>
    %116 = tpu.matmul %115, %114, %cst_67 {dimension_numbers = #tpu.dot_dimension_numbers<[1], [0], [0], [1], [0, 0, 1, 1], [], []>} : vector<32x4xbf16>, vector<4x4xbf16>, vector<32x4xf32> -> vector<32x4xf32>
    %117 = arith.addf %112, %116 : vector<32x4xf32>
    %c1_68 = arith.constant 1 : index
    %c0_69 = arith.constant 0 : index
    %c0_70 = arith.constant 0 : index
    %c0_71 = arith.constant 0 : index
    %118 = vector.load %arg8[%c1_68, %c0_69, %c0_70, %c0_71] : memref<3x3x4x4xbf16, #tpu.memory_space<vmem>>, vector<1x1x4x4xbf16>
    %119 = vector.shape_cast %118 : vector<1x1x4x4xbf16> to vector<4x4xbf16>
    %120 = arith.truncf %47 : vector<32x4xf32> to vector<32x4xbf16>
    %cst_72 = arith.constant dense<0.000000e+00> : vector<32x4xf32>
    %121 = tpu.matmul %120, %119, %cst_72 {dimension_numbers = #tpu.dot_dimension_numbers<[1], [0], [0], [1], [0, 0, 1, 1], [], []>} : vector<32x4xbf16>, vector<4x4xbf16>, vector<32x4xf32> -> vector<32x4xf32>
    %c2_73 = arith.constant 2 : index
    %c0_74 = arith.constant 0 : index
    %c0_75 = arith.constant 0 : index
    %c0_76 = arith.constant 0 : index
    %122 = vector.load %arg8[%c2_73, %c0_74, %c0_75, %c0_76] : memref<3x3x4x4xbf16, #tpu.memory_space<vmem>>, vector<1x1x4x4xbf16>
    %123 = vector.shape_cast %122 : vector<1x1x4x4xbf16> to vector<4x4xbf16>
    %124 = arith.truncf %86 : vector<32x4xf32> to vector<32x4xbf16>
    %cst_77 = arith.constant dense<0.000000e+00> : vector<32x4xf32>
    %125 = tpu.matmul %124, %123, %cst_77 {dimension_numbers = #tpu.dot_dimension_numbers<[1], [0], [0], [1], [0, 0, 1, 1], [], []>} : vector<32x4xbf16>, vector<4x4xbf16>, vector<32x4xf32> -> vector<32x4xf32>
    %126 = arith.addf %121, %125 : vector<32x4xf32>
    %c0_78 = arith.constant 0 : index
    %c0_79 = arith.constant 0 : index
    %c0_80 = arith.constant 0 : index
    %c0_81 = arith.constant 0 : index
    %127 = vector.load %arg8[%c0_78, %c0_79, %c0_80, %c0_81] : memref<3x3x4x4xbf16, #tpu.memory_space<vmem>>, vector<1x1x4x4xbf16>
    %128 = vector.shape_cast %127 : vector<1x1x4x4xbf16> to vector<4x4xbf16>
    %129 = arith.truncf %88 : vector<32x4xf32> to vector<32x4xbf16>
    %cst_82 = arith.constant dense<0.000000e+00> : vector<32x4xf32>
    %130 = tpu.matmul %129, %128, %cst_82 {dimension_numbers = #tpu.dot_dimension_numbers<[1], [0], [0], [1], [0, 0, 1, 1], [], []>} : vector<32x4xbf16>, vector<4x4xbf16>, vector<32x4xf32> -> vector<32x4xf32>
    %131 = arith.addf %126, %130 : vector<32x4xf32>
    %cst_83 = arith.constant 0.000000e+00 : f32
    %132 = vector.broadcast %cst_83 : f32 to vector<1x4xf32>
    %133 = vector.extract_strided_slice %131 {offsets = [0, 0], sizes = [31, 4], strides = [1, 1]} : vector<32x4xf32> to vector<31x4xf32>
    %134 = tpu.concatenate %132, %133 in 0 : vector<1x4xf32>, vector<31x4xf32> -> vector<32x4xf32>
    %135 = tpu.iota {dimensions = array<i32: 0>} : vector<32x4xi32>
    %c8_i32_84 = arith.constant 8 : i32
    %c0_i32_85 = arith.constant 0 : i32
    %136 = arith.cmpi eq, %c8_i32_84, %c0_i32_85 : i32
    %c1_i32 = arith.constant 1 : i32
    %137 = arith.select %136, %c1_i32, %c8_i32_84 : i32
    %138 = vector.broadcast %137 : i32 to vector<32x4xi32>
    %139 = arith.remsi %135, %138 : vector<32x4xi32>
    %c0_i32_86 = arith.constant 0 : i32
    %140 = vector.broadcast %c0_i32_86 : i32 to vector<32x4xi32>
    %141 = arith.cmpi ne, %139, %140 : vector<32x4xi32>
    %c0_i32_87 = arith.constant 0 : i32
    %142 = vector.broadcast %c0_i32_87 : i32 to vector<32x4xi32>
    %143 = arith.cmpi slt, %139, %142 : vector<32x4xi32>
    %c0_i32_88 = arith.constant 0 : i32
    %144 = arith.cmpi slt, %137, %c0_i32_88 : i32
    %145 = vector.broadcast %144 : i1 to vector<32x4xi1>
    %146 = vector.broadcast %145 : vector<32x4xi1> to vector<32x4xi1>
    %147 = arith.xori %143, %146 : vector<32x4xi1>
    %148 = arith.andi %147, %141 : vector<32x4xi1>
    %149 = vector.broadcast %137 : i32 to vector<32x4xi32>
    %150 = arith.addi %139, %149 : vector<32x4xi32>
    %151 = arith.select %148, %150, %139 : vector<32x4xi1>, vector<32x4xi32>
    %c0_i32_89 = arith.constant 0 : i32
    %152 = vector.broadcast %c0_i32_89 : i32 to vector<32x4xi32>
    %153 = arith.cmpi eq, %151, %152 : vector<32x4xi32>
    %cst_90 = arith.constant 0.000000e+00 : f32
    %154 = vector.broadcast %cst_90 : f32 to vector<32x4xf32>
    %155 = arith.select %153, %154, %134 : vector<32x4xi1>, vector<32x4xf32>
    %156 = arith.addf %117, %155 : vector<32x4xf32>
    %c0_91 = arith.constant 0 : index
    %c0_92 = arith.constant 0 : index
    %157 = vector.load %arg9[%c0_91, %c0_92] : memref<1x4xf32, #tpu.memory_space<vmem>>, vector<1x4xf32>
    %158 = vector.broadcast %157 : vector<1x4xf32> to vector<32x4xf32>
    %159 = arith.addf %156, %158 : vector<32x4xf32>
    %160 = arith.negf %159 : vector<32x4xf32>
    %161 = math.exp %160 : vector<32x4xf32>
    %cst_93 = arith.constant 1.000000e+00 : f32
    %162 = vector.broadcast %cst_93 : f32 to vector<32x4xf32>
    %163 = arith.addf %162, %161 : vector<32x4xf32>
    %164 = arith.divf %162, %163 : vector<32x4xf32>
    %165 = arith.mulf %159, %164 : vector<32x4xf32>
    %166 = vector.shape_cast %165 : vector<32x4xf32> to vector<4x8x4xf32>
    %c0_94 = arith.constant 0 : index
    %c0_95 = arith.constant 0 : index
    %c0_96 = arith.constant 0 : index
    %c0_97 = arith.constant 0 : index
    %167 = vector.load %arg10[%c0_94, %c0_95, %c0_96, %c0_97] : memref<1x4x8x8xf32, #tpu.memory_space<vmem>>, vector<1x4x8x4xf32>
    %168 = vector.shape_cast %167 : vector<1x4x8x4xf32> to vector<4x8x4xf32>
    %169 = vector.shape_cast %166 : vector<4x8x4xf32> to vector<1x4x8x4xf32>
    tpu.vector_store %arg10[%c0_94, %c0_95, %c0_96, %c0_97], %169 {strides = array<i32>} : memref<1x4x8x8xf32, #tpu.memory_space<vmem>>, vector<1x4x8x4xf32>,
    %170 = vector.shape_cast %22 : vector<32x4xf32> to vector<4x8x4xf32>
    %c0_98 = arith.constant 0 : index
    %c0_99 = arith.constant 0 : index
    %c0_100 = arith.constant 0 : index
    %c4 = arith.constant 4 : index
    %171 = vector.load %arg10[%c0_98, %c0_99, %c0_100, %c4] : memref<1x4x8x8xf32, #tpu.memory_space<vmem>>, vector<1x4x8x4xf32>
    %172 = vector.shape_cast %171 : vector<1x4x8x4xf32> to vector<4x8x4xf32>
    %173 = vector.shape_cast %170 : vector<4x8x4xf32> to vector<1x4x8x4xf32>
    tpu.vector_store %arg10[%c0_98, %c0_99, %c0_100, %c4], %173 {strides = array<i32>} : memref<1x4x8x8xf32, #tpu.memory_space<vmem>>, vector<1x4x8x4xf32>,
    return
  }
  func.func @transform_0(%arg0: i32, %arg1: i32) -> (i32, i32, i32, i32, i32) {
    %c0_i32 = arith.constant 0 : i32
    %c0_i32_0 = arith.constant 0 : i32
    %c0_i32_1 = arith.constant 0 : i32
    %c0_i32_2 = arith.constant 0 : i32
    return %arg0, %arg1, %c0_i32, %c0_i32_0, %c0_i32_1 : i32, i32, i32, i32, i32
  }
  func.func @transform_1(%arg0: i32, %arg1: i32) -> (i32, i32, i32, i32, i32) {
    %c4_i32 = arith.constant 4 : i32
    %0 = arith.muli %arg1, %c4_i32 : i32
    %c1_i32 = arith.constant 1 : i32
    %1 = arith.subi %0, %c1_i32 : i32
    %c0_i32 = arith.constant 0 : i32
    %2 = arith.maxsi %1, %c0_i32 : i32
    %c1_i32_0 = arith.constant 1 : i32
    %c0_i32_1 = arith.constant 0 : i32
    %c0_i32_2 = arith.constant 0 : i32
    %c0_i32_3 = arith.constant 0 : i32
    return %arg0, %2, %c1_i32_0, %c0_i32_1, %c0_i32_2 : i32, i32, i32, i32, i32
  }
  func.func @transform_2(%arg0: i32, %arg1: i32) -> (i32, i32) {
    %c0_i32 = arith.constant 0 : i32
    %c0_i32_0 = arith.constant 0 : i32
    %c0_i32_1 = arith.constant 0 : i32
    return %c0_i32, %c0_i32_0 : i32, i32
  }
  func.func @transform_3(%arg0: i32, %arg1: i32) -> (i32, i32) {
    %c0_i32 = arith.constant 0 : i32
    %c0_i32_0 = arith.constant 0 : i32
    %c0_i32_1 = arith.constant 0 : i32
    return %c0_i32, %c0_i32_0 : i32, i32
  }
  func.func @transform_4(%arg0: i32, %arg1: i32) -> (i32, i32) {
    %c0_i32 = arith.constant 0 : i32
    %c0_i32_0 = arith.constant 0 : i32
    %c0_i32_1 = arith.constant 0 : i32
    return %c0_i32, %c0_i32_0 : i32, i32
  }
  func.func @transform_5(%arg0: i32, %arg1: i32) -> (i32, i32) {
    %c0_i32 = arith.constant 0 : i32
    %c0_i32_0 = arith.constant 0 : i32
    %c0_i32_1 = arith.constant 0 : i32
    return %c0_i32, %c0_i32_0 : i32, i32
  }
  func.func @transform_6(%arg0: i32, %arg1: i32) -> (i32, i32, i32, i32) {
    %c0_i32 = arith.constant 0 : i32
    %c0_i32_0 = arith.constant 0 : i32
    %c0_i32_1 = arith.constant 0 : i32
    %c0_i32_2 = arith.constant 0 : i32
    %c0_i32_3 = arith.constant 0 : i32
    return %c0_i32, %c0_i32_0, %c0_i32_1, %c0_i32_2 : i32, i32, i32, i32
  }
  func.func @transform_7(%arg0: i32, %arg1: i32) -> (i32, i32) {
    %c0_i32 = arith.constant 0 : i32
    %c0_i32_0 = arith.constant 0 : i32
    %c0_i32_1 = arith.constant 0 : i32
    return %c0_i32, %c0_i32_0 : i32, i32
  }
  func.func @transform_8(%arg0: i32, %arg1: i32) -> (i32, i32, i32, i32) {
    %c0_i32 = arith.constant 0 : i32
    %c0_i32_0 = arith.constant 0 : i32
    %c0_i32_1 = arith.constant 0 : i32
    return %arg0, %arg1, %c0_i32, %c0_i32_0 : i32, i32, i32, i32
  }
}

</mosaic_0001>

<llo_original>
// kernel: _lambda_.1
$region0: #{_lambda_.1}
  #allocation0 [shape = 'u32[]', space=smem, size = 0x4, offset = 0x4, fixed_abs, tag = 'smem constant byte address 0x4 - core index']
  #allocation1 [shape = 'u32[144,128]{1,0:T(1,128)}', space=vmem, size = 0x12000, scoped, tag = 'internal scratch']
  %s0 = inlined_call_operand.vmem [shape: bf16[2,8,2,8,16], index: 0, kind: input, shape index: {}, may-alias: {0,1}]
  %s1 = inlined_call_operand.vmem [shape: bf16[2,8,2,8,16], index: 1, kind: input, shape index: {}, may-alias: {0,1}]
  %s2 = inlined_call_operand.vmem [shape: bf16[8,4], index: 2, kind: input, shape index: {}]
  %s3 = inlined_call_operand.vmem [shape: f32[1,4], index: 3, kind: input, shape index: {}]
  %s4 = inlined_call_operand.vmem [shape: bf16[8,4], index: 4, kind: input, shape index: {}]
  %s5 = inlined_call_operand.vmem [shape: f32[1,4], index: 5, kind: input, shape index: {}]
  %s6 = inlined_call_operand.vmem [shape: bf16[3,3,4,4], index: 6, kind: input, shape index: {}]
  %s7 = inlined_call_operand.vmem [shape: f32[1,4], index: 7, kind: input, shape index: {}]
  %s8 = inlined_call_operand.vmem [shape: f32[2,8,8,8], index: 8, kind: output, shape index: {}]
  %s9 = sld [smem:[#allocation0]]
  $region65: #{_lambda_.1} parent=0
    _
  %s11 = ssub.s32 1, %s9
  %s12 = scalar_select 0, %s11, %s9
  loop: start=0, step=1, limit=6
  $region2: #{_lambda_.1} parent=0 // loop_pre_header
    _
  $region3: #{_lambda_.1} parent=0 // loop_header
    %s14 = sphi 0, %s18
    %p15 = scmp.ge.s32.totalorder %s14, 6
    %s21 = sphi 0, %s33
    %s22 = sphi 0, %s29
    %s23 = sphi 0, %s21
    %s24 = sphi 0, %s22
    %s25 = sphi 0, %s23
    %s26 = sphi 0, %s24
    %s38 = sphi 0, %s40
    %s41 = sphi 0, %s38
    %s42 = sphi 0, %s41
    %s58 = sphi 0, %s42
    %s74 = sphi 0, %s76
    %s77 = sphi 0, %s74
    %s78 = sphi 0, %s77
    %s94 = sphi 0, %s78
    %s98 = sphi 0, %s98
    %s100 = sphi 0, %s98
    %s101 = sphi 0, %s100
    %s115 = sphi 0, %s101
    %s119 = sphi 0, %s119
    %s121 = sphi 0, %s119
    %s122 = sphi 0, %s121
    %s136 = sphi 0, %s122
    %s140 = sphi 0, %s140
    %s142 = sphi 0, %s140
    %s143 = sphi 0, %s142
    %s157 = sphi 0, %s143
    %s161 = sphi 0, %s161
    %s163 = sphi 0, %s161
    %s164 = sphi 0, %s163
    %s178 = sphi 0, %s164
    %s182 = sphi 0, %s182
    %s184 = sphi 0, %s182
    %s185 = sphi 0, %s184
    %s199 = sphi 0, %s185
    %s203 = sphi 0, %s203
    %s205 = sphi 0, %s203
    %s206 = sphi 0, %s205
    %s220 = sphi 0, %s206
    %s228 = sphi 0, %s230
    %s231 = sphi 0, %s228
    %s232 = sphi 0, %s231
    %s248 = sphi 0, %s232
  $region4: #{_lambda_.1} parent=0 // loop_header_branch
    %17 = sbr.rel (%p15) target = $region8
  $region5: #{_lambda_.1} parent=0 // loop_body
    %s19 = ssub.s32 %s14, 1
    %s20 = ssub.s32 %s14, 2
    %s27 = sadd.s32 1, %s22
    %p28 = scmp.ge.s32.totalorder %s27, 2
    %s29 = scalar_select %p28, 0, %s27
    %s30 = sadd.s32 1, %s21
    %s31 = scalar_select %p28, %s30, %s21
    %p32 = scmp.ge.s32.totalorder %s31, 2
    %s33 = scalar_select %p32, 0, %s31
    %s34 = ssub.s32 %s21, %s33
    %s35 = ssub.s32 %s22, %s29
    %s36 = sor.u32 %s34, %s35
    %p37 = scmp.eq.s32.totalorder %s36, 0
    %s39 = sadd.s32 %s38, 1
    %s40 = scalar_select %p37, %s38, %s39
    %p43 = pneg %p37
    %p44 = scmp.eq.s32.totalorder %s14, 3
    %p45 = por %p43, %p44
    %p46 = scmp.ne.s32.totalorder %s38, %s41
    %p47 = scmp.eq.s32.totalorder %s14, 0
    %p48 = por %p46, %p47
    %p49 = scmp.ne.s32.totalorder %s38, %s41
    %p50 = scmp.eq.s32.totalorder %s19, 3
    %p51 = por %p49, %p50
    %p52 = scmp.ne.s32.totalorder %s41, %s42
    %p53 = scmp.eq.s32.totalorder %s19, 0
    %p54 = por %p52, %p53
    %p55 = scmp.ne.s32.totalorder %s41, %s42
    %p56 = scmp.eq.s32.totalorder %s20, 3
    %p57 = por %p55, %p56
    %p59 = scmp.ne.s32.totalorder %s42, %s58
    %p60 = scmp.eq.s32.totalorder %s20, 0
    %p61 = por %p59, %p60
    %s62 = smul.u32 %s22, 4
    %s63 = ssub.s32 %s62, 1
    %p64 = scmp.gt.s32.totalorder %s63, 0
    %s65 = scalar_select %p64, %s63, 0
    %s66 = smul.u32 %s29, 4
    %s67 = ssub.s32 %s66, 1
    %p68 = scmp.gt.s32.totalorder %s67, 0
    %s69 = scalar_select %p68, %s67, 0
    %s70 = ssub.s32 %s21, %s33
    %s71 = ssub.s32 %s65, %s69
    %s72 = sor.u32 %s70, %s71
    %p73 = scmp.eq.s32.totalorder %s72, 0
    %s75 = sadd.s32 %s74, 1
    %s76 = scalar_select %p73, %s74, %s75
    %p79 = pneg %p73
    %p80 = scmp.eq.s32.totalorder %s14, 3
    %p81 = por %p79, %p80
    %p82 = scmp.ne.s32.totalorder %s74, %s77
    %p83 = scmp.eq.s32.totalorder %s14, 0
    %p84 = por %p82, %p83
    %p85 = scmp.ne.s32.totalorder %s74, %s77
    %p86 = scmp.eq.s32.totalorder %s19, 3
    %p87 = por %p85, %p86
    %p88 = scmp.ne.s32.totalorder %s77, %s78
    %p89 = scmp.eq.s32.totalorder %s19, 0
    %p90 = por %p88, %p89
    %p91 = scmp.ne.s32.totalorder %s77, %s78
    %p92 = scmp.eq.s32.totalorder %s20, 3
    %p93 = por %p91, %p92
    %p95 = scmp.ne.s32.totalorder %s78, %s94
    %p96 = scmp.eq.s32.totalorder %s20, 0
    %p97 = por %p95, %p96
    %s99 = sadd.s32 %s98, 1
    %p102 = scmp.eq.s32.totalorder %s14, 3
    %p103 = scmp.ne.s32.totalorder %s98, %s100
    %p104 = scmp.eq.s32.totalorder %s14, 0
    %p105 = por %p103, %p104
    %p106 = scmp.ne.s32.totalorder %s98, %s100
    %p107 = scmp.eq.s32.totalorder %s19, 3
    %p108 = por %p106, %p107
    %p109 = scmp.ne.s32.totalorder %s100, %s101
    %p110 = scmp.eq.s32.totalorder %s19, 0
    %p111 = por %p109, %p110
    %p112 = scmp.ne.s32.totalorder %s100, %s101
    %p113 = scmp.eq.s32.totalorder %s20, 3
    %p114 = por %p112, %p113
    %p116 = scmp.ne.s32.totalorder %s101, %s115
    %p117 = scmp.eq.s32.totalorder %s20, 0
    %p118 = por %p116, %p117
    %s120 = sadd.s32 %s119, 1
    %p123 = scmp.eq.s32.totalorder %s14, 3
    %p124 = scmp.ne.s32.totalorder %s119, %s121
    %p125 = scmp.eq.s32.totalorder %s14, 0
    %p126 = por %p124, %p125
    %p127 = scmp.ne.s32.totalorder %s119, %s121
    %p128 = scmp.eq.s32.totalorder %s19, 3
    %p129 = por %p127, %p128
    %p130 = scmp.ne.s32.totalorder %s121, %s122
    %p131 = scmp.eq.s32.totalorder %s19, 0
    %p132 = por %p130, %p131
    %p133 = scmp.ne.s32.totalorder %s121, %s122
    %p134 = scmp.eq.s32.totalorder %s20, 3
    %p135 = por %p133, %p134
    %p137 = scmp.ne.s32.totalorder %s122, %s136
    %p138 = scmp.eq.s32.totalorder %s20, 0
    %p139 = por %p137, %p138
    %s141 = sadd.s32 %s140, 1
    %p144 = scmp.eq.s32.totalorder %s14, 3
    %p145 = scmp.ne.s32.totalorder %s140, %s142
    %p146 = scmp.eq.s32.totalorder %s14, 0
    %p147 = por %p145, %p146
    %p148 = scmp.ne.s32.totalorder %s140, %s142
    %p149 = scmp.eq.s32.totalorder %s19, 3
    %p150 = por %p148, %p149
    %p151 = scmp.ne.s32.totalorder %s142, %s143
    %p152 = scmp.eq.s32.totalorder %s19, 0
    %p153 = por %p151, %p152
    %p154 = scmp.ne.s32.totalorder %s142, %s143
    %p155 = scmp.eq.s32.totalorder %s20, 3
    %p156 = por %p154, %p155
    %p158 = scmp.ne.s32.totalorder %s143, %s157
    %p159 = scmp.eq.s32.totalorder %s20, 0
    %p160 = por %p158, %p159
    %s162 = sadd.s32 %s161, 1
    %p165 = scmp.eq.s32.totalorder %s14, 3
    %p166 = scmp.ne.s32.totalorder %s161, %s163
    %p167 = scmp.eq.s32.totalorder %s14, 0
    %p168 = por %p166, %p167
    %p169 = scmp.ne.s32.totalorder %s161, %s163
    %p170 = scmp.eq.s32.totalorder %s19, 3
    %p171 = por %p169, %p170
    %p172 = scmp.ne.s32.totalorder %s163, %s164
    %p173 = scmp.eq.s32.totalorder %s19, 0
    %p174 = por %p172, %p173
    %p175 = scmp.ne.s32.totalorder %s163, %s164
    %p176 = scmp.eq.s32.totalorder %s20, 3
    %p177 = por %p175, %p176
    %p179 = scmp.ne.s32.totalorder %s164, %s178
    %p180 = scmp.eq.s32.totalorder %s20, 0
    %p181 = por %p179, %p180
    %s183 = sadd.s32 %s182, 1
    %p186 = scmp.eq.s32.totalorder %s14, 3
    %p187 = scmp.ne.s32.totalorder %s182, %s184
    %p188 = scmp.eq.s32.totalorder %s14, 0
    %p189 = por %p187, %p188
    %p190 = scmp.ne.s32.totalorder %s182, %s184
    %p191 = scmp.eq.s32.totalorder %s19, 3
    %p192 = por %p190, %p191
    %p193 = scmp.ne.s32.totalorder %s184, %s185
    %p194 = scmp.eq.s32.totalorder %s19, 0
    %p195 = por %p193, %p194
    %p196 = scmp.ne.s32.totalorder %s184, %s185
    %p197 = scmp.eq.s32.totalorder %s20, 3
    %p198 = por %p196, %p197
    %p200 = scmp.ne.s32.totalorder %s185, %s199
    %p201 = scmp.eq.s32.totalorder %s20, 0
    %p202 = por %p200, %p201
    %s204 = sadd.s32 %s203, 1
    %p207 = scmp.eq.s32.totalorder %s14, 3
    %p208 = scmp.ne.s32.totalorder %s203, %s205
    %p209 = scmp.eq.s32.totalorder %s14, 0
    %p210 = por %p208, %p209
    %p211 = scmp.ne.s32.totalorder %s203, %s205
    %p212 = scmp.eq.s32.totalorder %s19, 3
    %p213 = por %p211, %p212
    %p214 = scmp.ne.s32.totalorder %s205, %s206
    %p215 = scmp.eq.s32.totalorder %s19, 0
    %p216 = por %p214, %p215
    %p217 = scmp.ne.s32.totalorder %s205, %s206
    %p218 = scmp.eq.s32.totalorder %s20, 3
    %p219 = por %p217, %p218
    %p221 = scmp.ne.s32.totalorder %s206, %s220
    %p222 = scmp.eq.s32.totalorder %s20, 0
    %p223 = por %p221, %p222
    %s224 = ssub.s32 %s21, %s33
    %s225 = ssub.s32 %s22, %s29
    %s226 = sor.u32 %s224, %s225
    %p227 = scmp.eq.s32.totalorder %s226, 0
    %s229 = sadd.s32 %s228, 1
    %s230 = scalar_select %p227, %s228, %s229
    %p233 = pneg %p227
    %p234 = scmp.eq.s32.totalorder %s14, 3
    %p235 = por %p233, %p234
    %p236 = scmp.ne.s32.totalorder %s228, %s231
    %p237 = scmp.eq.s32.totalorder %s14, 0
    %p238 = por %p236, %p237
    %p239 = scmp.ne.s32.totalorder %s228, %s231
    %p240 = scmp.eq.s32.totalorder %s19, 3
    %p241 = por %p239, %p240
    %p242 = scmp.ne.s32.totalorder %s231, %s232
    %p243 = scmp.eq.s32.totalorder %s19, 0
    %p244 = por %p242, %p243
    %p245 = scmp.ne.s32.totalorder %s231, %s232
    %p246 = scmp.eq.s32.totalorder %s20, 3
    %p247 = por %p245, %p246
    %p249 = scmp.ne.s32.totalorder %s232, %s248
    %p250 = scmp.eq.s32.totalorder %s20, 0
    %p251 = por %p249, %p250
    %p252 = scmp.le.s32.totalorder 1, %s14
    %p253 = scmp.lt.s32.totalorder %s14, 5
    %p254 = pnand %p252, %p253
    %p255 = pneg %p254
    // Predicated region
    $region9: #{_lambda_.1} parent=5 // pred_check
      _
    $region10: #{_lambda_.1} parent=5 // pred_check_branch
      %257 = sbr.rel (%p254) target = $region12
    $region11: #{_lambda_.1} parent=5 // pred_region
      %s258 = ssub.s32 %s14, 1
      // Predicated region
      $region13: #{_lambda_.1} parent=11 // pred_check
        %p259 = pneg %p111
      $region14: #{_lambda_.1} parent=11 // pred_check_branch
        %261 = sbr.rel (%p259) target = $region16
      $region15: #{_lambda_.1} parent=11 // pred_region
        _
      $region16: #{_lambda_.1} parent=11 // pred_fallthru
        _
      // Predicated region
      $region17: #{_lambda_.1} parent=11 // pred_check
        %p262 = pneg %p132
      $region18: #{_lambda_.1} parent=11 // pred_check_branch
        %264 = sbr.rel (%p262) target = $region20
      $region19: #{_lambda_.1} parent=11 // pred_region
        _
      $region20: #{_lambda_.1} parent=11 // pred_fallthru
        _
      // Predicated region
      $region21: #{_lambda_.1} parent=11 // pred_check
        %p265 = pneg %p153
      $region22: #{_lambda_.1} parent=11 // pred_check_branch
        %267 = sbr.rel (%p265) target = $region24
      $region23: #{_lambda_.1} parent=11 // pred_region
        _
      $region24: #{_lambda_.1} parent=11 // pred_fallthru
        _
      // Predicated region
      $region25: #{_lambda_.1} parent=11 // pred_check
        %p268 = pneg %p174
      $region26: #{_lambda_.1} parent=11 // pred_check_branch
        %270 = sbr.rel (%p268) target = $region28
      $region27: #{_lambda_.1} parent=11 // pred_region
        _
      $region28: #{_lambda_.1} parent=11 // pred_fallthru
        _
      // Predicated region
      $region29: #{_lambda_.1} parent=11 // pred_check
        %p271 = pneg %p195
      $region30: #{_lambda_.1} parent=11 // pred_check_branch
        %273 = sbr.rel (%p271) target = $region32
      $region31: #{_lambda_.1} parent=11 // pred_region
        _
      $region32: #{_lambda_.1} parent=11 // pred_fallthru
        _
      // Predicated region
      $region33: #{_lambda_.1} parent=11 // pred_check
        %p274 = pneg %p216
      $region34: #{_lambda_.1} parent=11 // pred_check_branch
        %276 = sbr.rel (%p274) target = $region36
      $region35: #{_lambda_.1} parent=11 // pred_region
        _
      $region36: #{_lambda_.1} parent=11 // pred_fallthru
        _
    $region12: #{_lambda_.1} parent=5 // pred_fallthru
      _
    %p277 = scmp.lt.s32.totalorder %s14, 4
    // Predicated region
    $region37: #{_lambda_.1} parent=5 // pred_check
      %p278 = pneg %p277
    $region38: #{_lambda_.1} parent=5 // pred_check_branch
      %280 = sbr.rel (%p278) target = $region40
    $region39: #{_lambda_.1} parent=5 // pred_region
      // Predicated region
      $region41: #{_lambda_.1} parent=39 // pred_check
        %p281 = pneg %p48
      $region42: #{_lambda_.1} parent=39 // pred_check_branch
        %283 = sbr.rel (%p281) target = $region44
      $region43: #{_lambda_.1} parent=39 // pred_region
        %s284 = smul.u32 4, %s22
        %p285 = scmp.lt.s32.totalorder %s21, 1
        %s286 = scalar_select %p285, %s21, 1
        %p287 = scmp.lt.s32.totalorder %s284, 7
        %s288 = scalar_select %p287, %s284, 7
        %s289 = smul.addr %s288, 2
        %s290 = smul.addr %s286, 16
        %s291 = sadd.s32 %s289, %s290
        %s292 = smul.addr %s291, 4
        %s293 = scalar_lea.vmem %s0, %s292
        %s294 = smul.u32 4, %s22
      $region44: #{_lambda_.1} parent=39 // pred_fallthru
        _
      // Predicated region
      $region45: #{_lambda_.1} parent=39 // pred_check
        %p295 = pneg %p84
      $region46: #{_lambda_.1} parent=39 // pred_check_branch
        %297 = sbr.rel (%p295) target = $region48
      $region47: #{_lambda_.1} parent=39 // pred_region
        %s298 = smul.u32 %s22, 4
        %s299 = ssub.s32 %s298, 1
        %p300 = scmp.gt.s32.totalorder %s299, 0
        %s301 = scalar_select %p300, %s299, 0
        %p302 = scmp.lt.s32.totalorder %s21, 1
        %s303 = scalar_select %p302, %s21, 1
        %p304 = scmp.lt.s32.totalorder %s301, 7
        %s305 = scalar_select %p304, %s301, 7
        %s306 = smul.addr %s305, 2
        %s307 = sadd.s32 1, %s306
        %s308 = smul.addr %s303, 16
        %s309 = sadd.s32 %s307, %s308
        %s310 = smul.addr %s309, 4
        %s311 = scalar_lea.vmem %s1, %s310
        %s312 = smul.u32 %s22, 4
        %s313 = ssub.s32 %s312, 1
        %p314 = scmp.gt.s32.totalorder %s313, 0
        %s315 = scalar_select %p314, %s313, 0
      $region48: #{_lambda_.1} parent=39 // pred_fallthru
        _
    $region40: #{_lambda_.1} parent=5 // pred_fallthru
      _
    %p316 = scmp.le.s32.totalorder 1, %s14
    %p317 = scmp.lt.s32.totalorder %s14, 5
    %p318 = pnand %p316, %p317
    %p319 = pneg %p318
    // Predicated region
    $region49: #{_lambda_.1} parent=5 // pred_check
      _
    $region50: #{_lambda_.1} parent=5 // pred_check_branch
      %321 = sbr.rel (%p318) target = $region52
    $region51: #{_lambda_.1} parent=5 // pred_region
      %s322 = ssub.s32 %s14, 1
      %s323 = smul.u32 4, %s24
      %p324 = scmp.lt.s32.totalorder %s23, 1
      %s325 = scalar_select %p324, %s23, 1
      %p326 = scmp.lt.s32.totalorder %s323, 7
      %s327 = scalar_select %p326, %s323, 7
      %s328 = smul.addr %s327, 2
      %s329 = smul.addr %s325, 16
      %s330 = sadd.s32 %s328, %s329
      %s331 = smul.addr %s330, 4
      %s332 = scalar_lea.vmem %s0, %s331
      %p333 = pneg %p54
      %p334 = pneg %p51
      %s335 = smul.u32 %s24, 4
      %s336 = ssub.s32 %s335, 1
      %p337 = scmp.gt.s32.totalorder %s336, 0
      %s338 = scalar_select %p337, %s336, 0
      %p339 = scmp.lt.s32.totalorder %s23, 1
      %s340 = scalar_select %p339, %s23, 1
      %p341 = scmp.lt.s32.totalorder %s338, 7
      %s342 = scalar_select %p341, %s338, 7
      %s343 = smul.addr %s342, 2
      %s344 = sadd.s32 1, %s343
      %s345 = smul.addr %s340, 16
      %s346 = sadd.s32 %s344, %s345
      %s347 = smul.addr %s346, 4
      %s348 = scalar_lea.vmem %s1, %s347
      %p349 = pneg %p90
      %p350 = pneg %p87
      %p351 = pneg %p111
      %p352 = pneg %p108
      %p353 = pneg %p132
      %p354 = pneg %p129
      %p355 = pneg %p153
      %p356 = pneg %p150
      %p357 = pneg %p174
      %p358 = pneg %p171
      %p359 = pneg %p195
      %p360 = pneg %p192
      %p361 = pneg %p216
      %p362 = pneg %p213
      %p363 = pneg %p244
      %p364 = pneg %p241
      %s365 = smul.u32 4, %s24
      %p366 = scmp.lt.s32.totalorder %s23, 1
      %s367 = scalar_select %p366, %s23, 1
      %p368 = scmp.lt.s32.totalorder %s365, 7
      %s369 = scalar_select %p368, %s365, 7
      %s370 = smul.addr %s367, 8
      %s371 = sadd.s32 %s369, %s370
      %s372 = smul.addr %s371, 8
      %s373 = scalar_lea.vmem %s8, %s372
      %s374 = smul.u32 4, %s24
      %p375 = scmp.lt.s32.totalorder %s23, 1
      %s376 = scalar_select %p375, %s23, 1
      %p377 = scmp.lt.s32.totalorder %s374, 7
      %s378 = scalar_select %p377, %s374, 7
      %s379 = smul.addr %s378, 2
      %s380 = smul.addr %s376, 16
      %s381 = sadd.s32 %s379, %s380
      %s382 = smul.addr %s381, 4
      %s383 = scalar_lea.vmem %s0, %s382
      %s384 = smul.u32 4, %s24
      %s385 = smul.u32 %s24, 4
      %s386 = ssub.s32 %s385, 1
      %p387 = scmp.gt.s32.totalorder %s386, 0
      %s388 = scalar_select %p387, %s386, 0
      %p389 = scmp.lt.s32.totalorder %s23, 1
      %s390 = scalar_select %p389, %s23, 1
      %p391 = scmp.lt.s32.totalorder %s388, 7
      %s392 = scalar_select %p391, %s388, 7
      %s393 = smul.addr %s392, 2
      %s394 = sadd.s32 1, %s393
      %s395 = smul.addr %s390, 16
      %s396 = sadd.s32 %s394, %s395
      %s397 = smul.addr %s396, 4
      %s398 = scalar_lea.vmem %s1, %s397
      %s399 = smul.u32 %s24, 4
      %s400 = ssub.s32 %s399, 1
      %p401 = scmp.gt.s32.totalorder %s400, 0
      %s402 = scalar_select %p401, %s400, 0
      %s403 = smul.u32 4, %s24
      %p404 = scmp.lt.s32.totalorder %s23, 1
      %s405 = scalar_select %p404, %s23, 1
      %p406 = scmp.lt.s32.totalorder %s403, 7
      %s407 = scalar_select %p406, %s403, 7
      %s408 = smul.addr %s405, 8
      %s409 = sadd.s32 %s407, %s408
      %s410 = smul.addr %s409, 8
      %s411 = scalar_lea.vmem %s8, %s410
      %s412 = smul.u32 4, %s24
      %p414 = scmp.eq.s32.totalorder %s24, 0
      %v415 = vld [vmem:[%s383] sm:$0xf]
      %v416 = vld [vmem:[%s383 + $0x4] sm:$0xf]
      %v417 = vld [vmem:[%s383 + $0x8] sm:$0xf]
      %v418 = vld [vmem:[%s383 + $0xc] sm:$0xf]
      %v419 = vld [vmem:[%s383 + $0x10] sm:$0xf]
      %v420 = vld [vmem:[%s383 + $0x14] sm:$0xf]
      %v421 = vld [vmem:[%s383 + $0x18] sm:$0xf]
      %v422 = vld [vmem:[%s383 + $0x1c] sm:$0xf]
      %v423 = vmax.bf16 %v415, %v416
      %v424 = vmax.bf16 %v417, %v418
      %v425 = vmax.bf16 %v419, %v420
      %v426 = vmax.bf16 %v421, %v422
      %431 = vrot.lane.b32.xlu0 %v423, 120
      %v432 = vpop.permute.xlu0 %431
      %433 = vrot.lane.b32.xlu0 %v424, 120
      %v434 = vpop.permute.xlu0 %433
      %435 = vrot.lane.b32.xlu0 %v425, 120
      %v436 = vpop.permute.xlu0 %435
      %437 = vrot.lane.b32.xlu0 %v426, 120
      %v438 = vpop.permute.xlu0 %437
      %v443 = vmax.bf16 %v423, %v432
      %v444 = vmax.bf16 %v424, %v434
      %v445 = vmax.bf16 %v425, %v436
      %v446 = vmax.bf16 %v426, %v438
      %v447 = vld [vmem:[%s2] sm:$0xf]
      %v448 = vld [vmem:[%s3] sm:$0x1]
      %v450 = vlaneseq
      %v451 = vshrl.u32 %v450, 7
      %v452 = vsub.s32 0, %v451
      %v453 = vrot.slane %v448, %v452
      %v459 = vunpack.c.l.b16 %v443
      %v460 = vunpack.c.l.b16 %v444
      %v461 = vunpack.c.l.b16 %v445
      %v462 = vunpack.c.l.b16 %v446
      %v463 = vpack.c.b16 %v460, %v459
      %v464 = vpack.c.b16 %v462, %v461
      %vm465 = vcmask 64512
      %v467 = vsel %vm465, %v463, 0
      %v470 = vsel %vm465, %v464, 0
      %vm472 = vcmask 1043456
      %v474 = vsel %vm472, %v447, 0
      %476 = vmatprep.subr.bf16.mxu0 0
      %477 = vmatpush1.bf16.msra.mxu0 0
      %478 = vmatprep.subr.bf16.mxu0 0
      %479 = vmatpush1.bf16.msra.mxu0 0
      %480 = vmatprep.subr.bf16.mxu0 0
      %481 = vmatpush1.bf16.msra.mxu0 0
      %482 = vmatprep.subr.bf16.mxu0 0
      %483 = vmatpush1.bf16.msra.mxu0 0
      %484 = vmatprep.subr.bf16.mxu0 0
      %485 = vmatpush1.bf16.msra.mxu0 0
      %486 = vmatprep.subr.bf16.mxu0 0
      %487 = vmatpush1.bf16.msra.mxu0 0
      %488 = vmatprep.subr.bf16.mxu0 0
      %489 = vmatpush1.bf16.msra.mxu0 0
      %490 = vmatprep.subr.bf16.mxu0 0
      %491 = vmatpush1.bf16.msra.mxu0 %v474
      %492 = vmatprep.subr.bf16.mxu0 0
      %493 = vmatpush2.bf16.msra.mxu0 0
      %494 = vmatprep.subr.bf16.mxu0 0
      %495 = vmatpush2.bf16.msra.mxu0 0
      %496 = vmatprep.subr.bf16.mxu0 0
      %497 = vmatpush2.bf16.msra.mxu0 0
      %498 = vmatprep.subr.bf16.mxu0 0
      %499 = vmatpush2.bf16.msra.mxu0 0
      %500 = vmatprep.subr.bf16.mxu0 0
      %501 = vmatpush2.bf16.msra.mxu0 0
      %502 = vmatprep.subr.bf16.mxu0 0
      %503 = vmatpush2.bf16.msra.mxu0 0
      %504 = vmatprep.subr.bf16.mxu0 0
      %505 = vmatpush2.bf16.msra.mxu0 0
      %506 = vmatprep.subr.bf16.mxu0 0
      %507 = vmatpush2.bf16.msra.mxu0 0
      %508 = vmatprep.mubr.bf16.mxu0 0
      %509 = vmatmul.mubr.bf16.gmra.mxu0 %v467
      %v510 = vpop.f32.mrf.mxu0
      %v511 = vadd.f32 %v453, %v510
      %v512 = vpop.f32.mrf.mxu0
      %v513 = vpop.f32.mrf.mxu0
      %v514 = vadd.f32 %v453, %v513
      %v515 = vpop.f32.mrf.mxu0
      %516 = vmatprep.mubr.bf16.mxu0 0
      %517 = vmatmul.mubr.bf16.gmra.mxu0 %v470
      %v518 = vpop.f32.mrf.mxu0
      %v519 = vadd.f32 %v453, %v518
      %v520 = vpop.f32.mrf.mxu0
      %v521 = vpop.f32.mrf.mxu0
      %v522 = vadd.f32 %v453, %v521
      %v523 = vpop.f32.mrf.mxu0
      %524 = vdwg.mxu0
      %v525 = vxor.u32 %v511, 2147483648
      %v526 = vxor.u32 %v514, 2147483648
      %v527 = vxor.u32 %v519, 2147483648
      %v528 = vxor.u32 %v522, 2147483648
      %v529 = vmul.f32 %v525, 1.442695
      %v530 = vpow.pop %v529
      %v531 = vmul.f32 %v526, 1.442695
      %v532 = vpow.pop %v531
      %v533 = vmul.f32 %v527, 1.442695
      %v534 = vpow.pop %v533
      %v535 = vmul.f32 %v528, 1.442695
      %v536 = vpow.pop %v535
      %v537 = vadd.f32 %v530, 1.0
      %v538 = vadd.f32 %v532, 1.0
      %v539 = vadd.f32 %v534, 1.0
      %v540 = vadd.f32 %v536, 1.0
      %v541 = vrcp.pop %v537
      %v542 = vmul.f32 1.0, %v541
      %v543 = vrcp.pop %v538
      %v544 = vmul.f32 1.0, %v543
      %v545 = vrcp.pop %v539
      %v546 = vmul.f32 1.0, %v545
      %v547 = vrcp.pop %v540
      %v548 = vmul.f32 1.0, %v547
      %v549 = vmul.f32 %v511, %v542
      %v550 = vmul.f32 %v514, %v544
      %v551 = vmul.f32 %v519, %v546
      %v552 = vmul.f32 %v522, %v548
      %v553 = vld [vmem:[%s4] sm:$0xf]
      %v554 = vld [vmem:[%s5] sm:$0x1]
      %v556 = vlaneseq
      %v557 = vshrl.u32 %v556, 7
      %v558 = vsub.s32 0, %v557
      %v559 = vrot.slane %v554, %v558
      %v565 = vunpack.c.l.b16 %v415
      %v566 = vunpack.c.l.b16 %v417
      %v567 = vunpack.c.l.b16 %v419
      %v568 = vunpack.c.l.b16 %v421
      %v569 = vpack.c.b16 %v566, %v565
      %v570 = vpack.c.b16 %v568, %v567
      %v572 = vsel %vm465, %v569, 0
      %v575 = vsel %vm465, %v570, 0
      %v578 = vsel %vm472, %v553, 0
      %580 = vmatprep.subr.bf16.mxu0 0
      %581 = vmatpush1.bf16.msra.mxu0 0
      %582 = vmatprep.subr.bf16.mxu0 0
      %583 = vmatpush1.bf16.msra.mxu0 0
      %584 = vmatprep.subr.bf16.mxu0 0
      %585 = vmatpush1.bf16.msra.mxu0 0
      %586 = vmatprep.subr.bf16.mxu0 0
      %587 = vmatpush1.bf16.msra.mxu0 0
      %588 = vmatprep.subr.bf16.mxu0 0
      %589 = vmatpush1.bf16.msra.mxu0 0
      %590 = vmatprep.subr.bf16.mxu0 0
      %591 = vmatpush1.bf16.msra.mxu0 0
      %592 = vmatprep.subr.bf16.mxu0 0
      %593 = vmatpush1.bf16.msra.mxu0 0
      %594 = vmatprep.subr.bf16.mxu0 0
      %595 = vmatpush1.bf16.msra.mxu0 %v578
      %596 = vmatprep.subr.bf16.mxu0 0
      %597 = vmatpush2.bf16.msra.mxu0 0
      %598 = vmatprep.subr.bf16.mxu0 0
      %599 = vmatpush2.bf16.msra.mxu0 0
      %600 = vmatprep.subr.bf16.mxu0 0
      %601 = vmatpush2.bf16.msra.mxu0 0
      %602 = vmatprep.subr.bf16.mxu0 0
      %603 = vmatpush2.bf16.msra.mxu0 0
      %604 = vmatprep.subr.bf16.mxu0 0
      %605 = vmatpush2.bf16.msra.mxu0 0
      %606 = vmatprep.subr.bf16.mxu0 0
      %607 = vmatpush2.bf16.msra.mxu0 0
      %608 = vmatprep.subr.bf16.mxu0 0
      %609 = vmatpush2.bf16.msra.mxu0 0
      %610 = vmatprep.subr.bf16.mxu0 0
      %611 = vmatpush2.bf16.msra.mxu0 0
      %612 = vmatprep.mubr.bf16.mxu0 0
      %613 = vmatmul.mubr.bf16.gmra.mxu0 %v572
      %v614 = vpop.f32.mrf.mxu0
      %v615 = vadd.f32 %v559, %v614
      %v616 = vpop.f32.mrf.mxu0
      %v617 = vpop.f32.mrf.mxu0
      %v618 = vadd.f32 %v559, %v617
      %v619 = vpop.f32.mrf.mxu0
      %620 = vmatprep.mubr.bf16.mxu0 0
      %621 = vmatmul.mubr.bf16.gmra.mxu0 %v575
      %v622 = vpop.f32.mrf.mxu0
      %v623 = vadd.f32 %v559, %v622
      %v624 = vpop.f32.mrf.mxu0
      %v625 = vpop.f32.mrf.mxu0
      %v626 = vadd.f32 %v559, %v625
      %v627 = vpop.f32.mrf.mxu0
      %628 = vdwg.mxu0
      %v629 = vxor.u32 %v615, 2147483648
      %v630 = vxor.u32 %v618, 2147483648
      %v631 = vxor.u32 %v623, 2147483648
      %v632 = vxor.u32 %v626, 2147483648
      %v633 = vmul.f32 %v629, 1.442695
      %v634 = vpow.pop %v633
      %v635 = vmul.f32 %v630, 1.442695
      %v636 = vpow.pop %v635
      %v637 = vmul.f32 %v631, 1.442695
      %v638 = vpow.pop %v637
      %v639 = vmul.f32 %v632, 1.442695
      %v640 = vpow.pop %v639
      %v641 = vadd.f32 %v634, 1.0
      %v642 = vadd.f32 %v636, 1.0
      %v643 = vadd.f32 %v638, 1.0
      %v644 = vadd.f32 %v640, 1.0
      %v645 = vrcp.pop %v641
      %v646 = vmul.f32 1.0, %v645
      %v647 = vrcp.pop %v642
      %v648 = vmul.f32 1.0, %v647
      %v649 = vrcp.pop %v643
      %v650 = vmul.f32 1.0, %v649
      %v651 = vrcp.pop %v644
      %v652 = vmul.f32 1.0, %v651
      %v653 = vmul.f32 %v615, %v646
      %v654 = vmul.f32 %v618, %v648
      %v655 = vmul.f32 %v623, %v650
      %v656 = vmul.f32 %v626, %v652
      %657 = vrot.lane.b32.xlu0 %v569, 120
      %v658 = vpop.permute.xlu0 %657
      %659 = vrot.lane.b32.xlu0 %v570, 120
      %v660 = vpop.permute.xlu0 %659
      %v662 = vsel %vm465, %v658, 0
      %v665 = vsel %vm465, %v660, 0
      %667 = vmatprep.subr.bf16.mxu0 0
      %668 = vmatpush1.bf16.msra.mxu0 0
      %669 = vmatprep.subr.bf16.mxu0 0
      %670 = vmatpush1.bf16.msra.mxu0 0
      %671 = vmatprep.subr.bf16.mxu0 0
      %672 = vmatpush1.bf16.msra.mxu0 0
      %673 = vmatprep.subr.bf16.mxu0 0
      %674 = vmatpush1.bf16.msra.mxu0 0
      %675 = vmatprep.subr.bf16.mxu0 0
      %676 = vmatpush1.bf16.msra.mxu0 0
      %677 = vmatprep.subr.bf16.mxu0 0
      %678 = vmatpush1.bf16.msra.mxu0 0
      %679 = vmatprep.subr.bf16.mxu0 0
      %680 = vmatpush1.bf16.msra.mxu0 0
      %681 = vmatprep.subr.bf16.mxu0 0
      %682 = vmatpush1.bf16.msra.mxu0 %v578
      %683 = vmatprep.subr.bf16.mxu0 0
      %684 = vmatpush2.bf16.msra.mxu0 0
      %685 = vmatprep.subr.bf16.mxu0 0
      %686 = vmatpush2.bf16.msra.mxu0 0
      %687 = vmatprep.subr.bf16.mxu0 0
      %688 = vmatpush2.bf16.msra.mxu0 0
      %689 = vmatprep.subr.bf16.mxu0 0
      %690 = vmatpush2.bf16.msra.mxu0 0
      %691 = vmatprep.subr.bf16.mxu0 0
      %692 = vmatpush2.bf16.msra.mxu0 0
      %693 = vmatprep.subr.bf16.mxu0 0
      %694 = vmatpush2.bf16.msra.mxu0 0
      %695 = vmatprep.subr.bf16.mxu0 0
      %696 = vmatpush2.bf16.msra.mxu0 0
      %697 = vmatprep.subr.bf16.mxu0 0
      %698 = vmatpush2.bf16.msra.mxu0 0
      %699 = vmatprep.mubr.bf16.mxu0 0
      %700 = vmatmul.mubr.bf16.gmra.mxu0 %v662
      %v701 = vpop.f32.mrf.mxu0
      %v702 = vadd.f32 %v559, %v701
      %v703 = vpop.f32.mrf.mxu0
      %v704 = vpop.f32.mrf.mxu0
      %v705 = vadd.f32 %v559, %v704
      %v706 = vpop.f32.mrf.mxu0
      %707 = vmatprep.mubr.bf16.mxu0 0
      %708 = vmatmul.mubr.bf16.gmra.mxu0 %v665
      %v709 = vpop.f32.mrf.mxu0
      %v710 = vadd.f32 %v559, %v709
      %v711 = vpop.f32.mrf.mxu0
      %v712 = vpop.f32.mrf.mxu0
      %v713 = vadd.f32 %v559, %v712
      %v714 = vpop.f32.mrf.mxu0
      %715 = vdwg.mxu0
      %v716 = vxor.u32 %v702, 2147483648
      %v717 = vxor.u32 %v705, 2147483648
      %v718 = vxor.u32 %v710, 2147483648
      %v719 = vxor.u32 %v713, 2147483648
      %v720 = vmul.f32 %v716, 1.442695
      %v721 = vpow.pop %v720
      %v722 = vmul.f32 %v717, 1.442695
      %v723 = vpow.pop %v722
      %v724 = vmul.f32 %v718, 1.442695
      %v725 = vpow.pop %v724
      %v726 = vmul.f32 %v719, 1.442695
      %v727 = vpow.pop %v726
      %v728 = vadd.f32 %v721, 1.0
      %v729 = vadd.f32 %v723, 1.0
      %v730 = vadd.f32 %v725, 1.0
      %v731 = vadd.f32 %v727, 1.0
      %v732 = vrcp.pop %v728
      %v733 = vmul.f32 1.0, %v732
      %v734 = vrcp.pop %v729
      %v735 = vmul.f32 1.0, %v734
      %v736 = vrcp.pop %v730
      %v737 = vmul.f32 1.0, %v736
      %v738 = vrcp.pop %v731
      %v739 = vmul.f32 1.0, %v738
      %v740 = vmul.f32 %v702, %v733
      %v741 = vmul.f32 %v705, %v735
      %v742 = vmul.f32 %v710, %v737
      %v743 = vmul.f32 %v713, %v739
      %v744 = vld [vmem:[%s398] sm:$0xf]
      %v749 = vunpack.c.l.b16 %v416
      %v750 = vunpack.c.l.b16 %v418
      %v751 = vunpack.c.l.b16 %v420
      %v752 = vunpack.c.l.b16 %v422
      %v753 = vpack.c.b16 %v749, %v749
      %v754 = vpack.c.b16 %v751, %v750
      %v755 = vpack.c.b16 %v752, %v752
      %v758 = vsel %vm472, %v744, %v753
      %v759 = vsel %vm465, %v758, 0
      %v762 = vsel %vm465, %v754, 0
      %v765 = vsel %vm465, %v755, 0
      %767 = vmatprep.subr.bf16.mxu0 0
      %768 = vmatpush1.bf16.msra.mxu0 0
      %769 = vmatprep.subr.bf16.mxu0 0
      %770 = vmatpush1.bf16.msra.mxu0 0
      %771 = vmatprep.subr.bf16.mxu0 0
      %772 = vmatpush1.bf16.msra.mxu0 0
      %773 = vmatprep.subr.bf16.mxu0 0
      %774 = vmatpush1.bf16.msra.mxu0 0
      %775 = vmatprep.subr.bf16.mxu0 0
      %776 = vmatpush1.bf16.msra.mxu0 0
      %777 = vmatprep.subr.bf16.mxu0 0
      %778 = vmatpush1.bf16.msra.mxu0 0
      %779 = vmatprep.subr.bf16.mxu0 0
      %780 = vmatpush1.bf16.msra.mxu0 0
      %781 = vmatprep.subr.bf16.mxu0 0
      %782 = vmatpush1.bf16.msra.mxu0 %v578
      %783 = vmatprep.subr.bf16.mxu0 0
      %784 = vmatpush2.bf16.msra.mxu0 0
      %785 = vmatprep.subr.bf16.mxu0 0
      %786 = vmatpush2.bf16.msra.mxu0 0
      %787 = vmatprep.subr.bf16.mxu0 0
      %788 = vmatpush2.bf16.msra.mxu0 0
      %789 = vmatprep.subr.bf16.mxu0 0
      %790 = vmatpush2.bf16.msra.mxu0 0
      %791 = vmatprep.subr.bf16.mxu0 0
      %792 = vmatpush2.bf16.msra.mxu0 0
      %793 = vmatprep.subr.bf16.mxu0 0
      %794 = vmatpush2.bf16.msra.mxu0 0
      %795 = vmatprep.subr.bf16.mxu0 0
      %796 = vmatpush2.bf16.msra.mxu0 0
      %797 = vmatprep.subr.bf16.mxu0 0
      %798 = vmatpush2.bf16.msra.mxu0 0
      %799 = vmatprep.mubr.bf16.mxu0 0
      %800 = vmatmul.mubr.bf16.gmra.mxu0 %v759
      %v801 = vpop.f32.mrf.mxu0
      %v802 = vadd.f32 %v559, %v801
      %v803 = vpop.f32.mrf.mxu0
      %v804 = vpop.f32.mrf.mxu0
      %v805 = vadd.f32 %v559, %v804
      %v806 = vpop.f32.mrf.mxu0
      %807 = vmatprep.mubr.bf16.mxu0 0
      %808 = vmatmul.mubr.bf16.gmra.mxu0 %v762
      %v809 = vpop.f32.mrf.mxu0
      %v810 = vadd.f32 %v559, %v809
      %v811 = vpop.f32.mrf.mxu0
      %v812 = vpop.f32.mrf.mxu0
      %v813 = vadd.f32 %v559, %v812
      %v814 = vpop.f32.mrf.mxu0
      %815 = vmatprep.mubr.bf16.mxu0 0
      %816 = vmatmul.mubr.bf16.gmra.mxu0 %v765
      %v817 = vpop.f32.mrf.mxu0
      %v818 = vadd.f32 %v559, %v817
      %v819 = vpop.f32.mrf.mxu0
      %v820 = vpop.f32.mrf.mxu0
      %v821 = vpop.f32.mrf.mxu0
      %822 = vdwg.mxu0
      %v823 = vxor.u32 %v802, 2147483648
      %v824 = vxor.u32 %v805, 2147483648
      %v825 = vxor.u32 %v810, 2147483648
      %v826 = vxor.u32 %v813, 2147483648
      %v827 = vxor.u32 %v818, 2147483648
      %v828 = vmul.f32 %v823, 1.442695
      %v829 = vpow.pop %v828
      %v830 = vmul.f32 %v824, 1.442695
      %v831 = vpow.pop %v830
      %v832 = vmul.f32 %v825, 1.442695
      %v833 = vpow.pop %v832
      %v834 = vmul.f32 %v826, 1.442695
      %v835 = vpow.pop %v834
      %v836 = vmul.f32 %v827, 1.442695
      %v837 = vpow.pop %v836
      %v838 = vadd.f32 %v829, 1.0
      %v839 = vadd.f32 %v831, 1.0
      %v840 = vadd.f32 %v833, 1.0
      %v841 = vadd.f32 %v835, 1.0
      %v842 = vadd.f32 %v837, 1.0
      %v843 = vrcp.pop %v838
      %v844 = vmul.f32 1.0, %v843
      %v845 = vrcp.pop %v839
      %v846 = vmul.f32 1.0, %v845
      %v847 = vrcp.pop %v840
      %v848 = vmul.f32 1.0, %v847
      %v849 = vrcp.pop %v841
      %v850 = vmul.f32 1.0, %v849
      %v851 = vrcp.pop %v842
      %v852 = vmul.f32 1.0, %v851
      %v853 = vmul.f32 %v802, %v844
      %v854 = vmul.f32 %v805, %v846
      %v855 = vmul.f32 %v810, %v848
      %v856 = vmul.f32 %v813, %v850
      %v857 = vmul.f32 %v818, %v852
      %859 = vrot.lane.b32.xlu0 %v758, 120
      %v860 = vpop.permute.xlu0 %859
      %861 = vrot.lane.b32.xlu0 %v754, 120
      %v862 = vpop.permute.xlu0 %861
      %863 = vrot.lane.b32.xlu0 %v755, 120
      %v864 = vpop.permute.xlu0 %863
      %v866 = vsel %vm465, %v860, 0
      %v869 = vsel %vm465, %v862, 0
      %v872 = vsel %vm465, %v864, 0
      %874 = vmatprep.subr.bf16.mxu0 0
      %875 = vmatpush1.bf16.msra.mxu0 0
      %876 = vmatprep.subr.bf16.mxu0 0
      %877 = vmatpush1.bf16.msra.mxu0 0
      %878 = vmatprep.subr.bf16.mxu0 0
      %879 = vmatpush1.bf16.msra.mxu0 0
      %880 = vmatprep.subr.bf16.mxu0 0
      %881 = vmatpush1.bf16.msra.mxu0 0
      %882 = vmatprep.subr.bf16.mxu0 0
      %883 = vmatpush1.bf16.msra.mxu0 0
      %884 = vmatprep.subr.bf16.mxu0 0
      %885 = vmatpush1.bf16.msra.mxu0 0
      %886 = vmatprep.subr.bf16.mxu0 0
      %887 = vmatpush1.bf16.msra.mxu0 0
      %888 = vmatprep.subr.bf16.mxu0 0
      %889 = vmatpush1.bf16.msra.mxu0 %v578
      %890 = vmatprep.subr.bf16.mxu0 0
      %891 = vmatpush2.bf16.msra.mxu0 0
      %892 = vmatprep.subr.bf16.mxu0 0
      %893 = vmatpush2.bf16.msra.mxu0 0
      %894 = vmatprep.subr.bf16.mxu0 0
      %895 = vmatpush2.bf16.msra.mxu0 0
      %896 = vmatprep.subr.bf16.mxu0 0
      %897 = vmatpush2.bf16.msra.mxu0 0
      %898 = vmatprep.subr.bf16.mxu0 0
      %899 = vmatpush2.bf16.msra.mxu0 0
      %900 = vmatprep.subr.bf16.mxu0 0
      %901 = vmatpush2.bf16.msra.mxu0 0
      %902 = vmatprep.subr.bf16.mxu0 0
      %903 = vmatpush2.bf16.msra.mxu0 0
      %904 = vmatprep.subr.bf16.mxu0 0
      %905 = vmatpush2.bf16.msra.mxu0 0
      %906 = vmatprep.mubr.bf16.mxu0 0
      %907 = vmatmul.mubr.bf16.gmra.mxu0 %v866
      %v908 = vpop.f32.mrf.mxu0
      %v909 = vadd.f32 %v559, %v908
      %v910 = vpop.f32.mrf.mxu0
      %v911 = vpop.f32.mrf.mxu0
      %v912 = vadd.f32 %v559, %v911
      %v913 = vpop.f32.mrf.mxu0
      %914 = vmatprep.mubr.bf16.mxu0 0
      %915 = vmatmul.mubr.bf16.gmra.mxu0 %v869
      %v916 = vpop.f32.mrf.mxu0
      %v917 = vadd.f32 %v559, %v916
      %v918 = vpop.f32.mrf.mxu0
      %v919 = vpop.f32.mrf.mxu0
      %v920 = vadd.f32 %v559, %v919
      %v921 = vpop.f32.mrf.mxu0
      %922 = vmatprep.mubr.bf16.mxu0 0
      %923 = vmatmul.mubr.bf16.gmra.mxu0 %v872
      %v924 = vpop.f32.mrf.mxu0
      %v925 = vadd.f32 %v559, %v924
      %v926 = vpop.f32.mrf.mxu0
      %v927 = vpop.f32.mrf.mxu0
      %v928 = vpop.f32.mrf.mxu0
      %929 = vdwg.mxu0
      %v930 = vxor.u32 %v909, 2147483648
      %v931 = vxor.u32 %v912, 2147483648
      %v932 = vxor.u32 %v917, 2147483648
      %v933 = vxor.u32 %v920, 2147483648
      %v934 = vxor.u32 %v925, 2147483648
      %v935 = vmul.f32 %v930, 1.442695
      %v936 = vpow.pop %v935
      %v937 = vmul.f32 %v931, 1.442695
      %v938 = vpow.pop %v937
      %v939 = vmul.f32 %v932, 1.442695
      %v940 = vpow.pop %v939
      %v941 = vmul.f32 %v933, 1.442695
      %v942 = vpow.pop %v941
      %v943 = vmul.f32 %v934, 1.442695
      %v944 = vpow.pop %v943
      %v945 = vadd.f32 %v936, 1.0
      %v946 = vadd.f32 %v938, 1.0
      %v947 = vadd.f32 %v940, 1.0
      %v948 = vadd.f32 %v942, 1.0
      %v949 = vadd.f32 %v944, 1.0
      %v950 = vrcp.pop %v945
      %v951 = vmul.f32 1.0, %v950
      %v952 = vrcp.pop %v946
      %v953 = vmul.f32 1.0, %v952
      %v954 = vrcp.pop %v947
      %v955 = vmul.f32 1.0, %v954
      %v956 = vrcp.pop %v948
      %v957 = vmul.f32 1.0, %v956
      %v958 = vrcp.pop %v949
      %v959 = vmul.f32 1.0, %v958
      %v960 = vmul.f32 %v909, %v951
      %v961 = vmul.f32 %v912, %v953
      %v962 = vmul.f32 %v917, %v955
      %v963 = vmul.f32 %v920, %v957
      %v964 = vmul.f32 %v925, %v959
      %v965 = vlaneseq
      %v966 = vshrl.u32 %v965, 7
      %v967 = vadd.s32 %v966, 8
      %v968 = vadd.s32 %v966, 16
      %v969 = vadd.s32 %v966, 24
      %v970 = vadd.s32 %v966, 32
      %vm971 = vcmp.lt.s32.totalorder %v966, 8
      %vm972 = vcmp.lt.s32.totalorder %v967, 8
      %vm973 = vcmp.lt.s32.totalorder %v968, 8
      %vm974 = vcmp.lt.s32.totalorder %v969, 8
      %vm975 = vcmp.lt.s32.totalorder %v970, 8
      %s976 = scalar_select %p414, 1, 0
      %v977 = vstv %s976
      %vm978 = vcmp.eq.s32.totalorder %v977, 1
      %vm979 = vmand %vm978, %vm971
      %vm980 = vmand %vm978, %vm972
      %vm981 = vmand %vm978, %vm973
      %vm982 = vmand %vm978, %vm974
      %vm983 = vmand %vm978, %vm975
      %v984 = vsel %vm979, 0.0, %v853
      %v985 = vsel %vm980, 0.0, %v854
      %v986 = vsel %vm981, 0.0, %v855
      %v987 = vsel %vm982, 0.0, %v856
      %v988 = vsel %vm983, 0.0, %v857
      %v989 = vsel %vm979, 0.0, %v960
      %v990 = vsel %vm980, 0.0, %v961
      %v991 = vsel %vm981, 0.0, %v962
      %v992 = vsel %vm982, 0.0, %v963
      %v993 = vsel %vm983, 0.0, %v964
      %s994 = scalar_lea.vmem %s6, 8
      %v995 = vld [vmem:[%s994] sm:$0x3]
      %v996 = vpack.c.bf16 %v654, %v653
      %v997 = vpack.c.bf16 %v656, %v655
      %s998 = scalar_lea.vmem %s6, 10
      %v999 = vld [vmem:[%s998] sm:$0x3]
      %v1000 = vpack.c.bf16 %v741, %v740
      %v1001 = vpack.c.bf16 %v743, %v742
      %vm1002 = vcmask 31744
      %v1004 = vsel %vm1002, %v1000, 0
      %v1007 = vsel %vm1002, %v1001, 0
      %vm1009 = vcmask 1041408
      %v1011 = vsel %vm1009, %v999, 0
      %1013 = vmatprep.subr.bf16.mxu0 0
      %1014 = vmatpush1.bf16.msra.mxu0 0
      %1015 = vmatprep.subr.bf16.mxu0 0
      %1016 = vmatpush1.bf16.msra.mxu0 0
      %1017 = vmatprep.subr.bf16.mxu0 0
      %1018 = vmatpush1.bf16.msra.mxu0 0
      %1019 = vmatprep.subr.bf16.mxu0 0
      %1020 = vmatpush1.bf16.msra.mxu0 0
      %1021 = vmatprep.subr.bf16.mxu0 0
      %1022 = vmatpush1.bf16.msra.mxu0 0
      %1023 = vmatprep.subr.bf16.mxu0 0
      %1024 = vmatpush1.bf16.msra.mxu0 0
      %1025 = vmatprep.subr.bf16.mxu0 0
      %1026 = vmatpush1.bf16.msra.mxu0 0
      %1027 = vmatprep.subr.bf16.mxu0 0
      %1028 = vmatpush1.bf16.msra.mxu0 %v1011
      %1029 = vmatprep.subr.bf16.mxu0 0
      %1030 = vmatpush2.bf16.msra.mxu0 0
      %1031 = vmatprep.subr.bf16.mxu0 0
      %1032 = vmatpush2.bf16.msra.mxu0 0
      %1033 = vmatprep.subr.bf16.mxu0 0
      %1034 = vmatpush2.bf16.msra.mxu0 0
      %1035 = vmatprep.subr.bf16.mxu0 0
      %1036 = vmatpush2.bf16.msra.mxu0 0
      %1037 = vmatprep.subr.bf16.mxu0 0
      %1038 = vmatpush2.bf16.msra.mxu0 0
      %1039 = vmatprep.subr.bf16.mxu0 0
      %1040 = vmatpush2.bf16.msra.mxu0 0
      %1041 = vmatprep.subr.bf16.mxu0 0
      %1042 = vmatpush2.bf16.msra.mxu0 0
      %1043 = vmatprep.subr.bf16.mxu0 0
      %1044 = vmatpush2.bf16.msra.mxu0 0
      %1045 = vmatprep.mubr.bf16.mxu0 0
      %1046 = vmatmul.mubr.bf16.gmra.mxu0 %v1004
      %v1047 = vpop.f32.mrf.mxu0
      %v1048 = vadd.f32 0.0, %v1047
      %v1049 = vpop.f32.mrf.mxu0
      %v1050 = vpop.f32.mrf.mxu0
      %v1051 = vadd.f32 0.0, %v1050
      %v1052 = vpop.f32.mrf.mxu0
      %1053 = vmatprep.mubr.bf16.mxu0 0
      %1054 = vmatmul.mubr.bf16.gmra.mxu0 %v1007
      %v1055 = vpop.f32.mrf.mxu0
      %v1056 = vadd.f32 0.0, %v1055
      %v1057 = vpop.f32.mrf.mxu0
      %v1058 = vpop.f32.mrf.mxu0
      %v1059 = vadd.f32 0.0, %v1058
      %v1060 = vpop.f32.mrf.mxu0
      %1061 = vdwg.mxu0
      %v1063 = vsel %vm1002, %v996, 0
      %v1066 = vsel %vm1002, %v997, 0
      %v1069 = vsel %vm1009, %v995, 0
      %1071 = vmatprep.subr.bf16.mxu0 0
      %1072 = vmatpush1.bf16.msra.mxu0 0
      %1073 = vmatprep.subr.bf16.mxu0 0
      %1074 = vmatpush1.bf16.msra.mxu0 0
      %1075 = vmatprep.subr.bf16.mxu0 0
      %1076 = vmatpush1.bf16.msra.mxu0 0
      %1077 = vmatprep.subr.bf16.mxu0 0
      %1078 = vmatpush1.bf16.msra.mxu0 0
      %1079 = vmatprep.subr.bf16.mxu0 0
      %1080 = vmatpush1.bf16.msra.mxu0 0
      %1081 = vmatprep.subr.bf16.mxu0 0
      %1082 = vmatpush1.bf16.msra.mxu0 0
      %1083 = vmatprep.subr.bf16.mxu0 0
      %1084 = vmatpush1.bf16.msra.mxu0 0
      %1085 = vmatprep.subr.bf16.mxu0 0
      %1086 = vmatpush1.bf16.msra.mxu0 %v1069
      %1087 = vmatprep.subr.bf16.mxu0 0
      %1088 = vmatpush2.bf16.msra.mxu0 0
      %1089 = vmatprep.subr.bf16.mxu0 0
      %1090 = vmatpush2.bf16.msra.mxu0 0
      %1091 = vmatprep.subr.bf16.mxu0 0
      %1092 = vmatpush2.bf16.msra.mxu0 0
      %1093 = vmatprep.subr.bf16.mxu0 0
      %1094 = vmatpush2.bf16.msra.mxu0 0
      %1095 = vmatprep.subr.bf16.mxu0 0
      %1096 = vmatpush2.bf16.msra.mxu0 0
      %1097 = vmatprep.subr.bf16.mxu0 0
      %1098 = vmatpush2.bf16.msra.mxu0 0
      %1099 = vmatprep.subr.bf16.mxu0 0
      %1100 = vmatpush2.bf16.msra.mxu0 0
      %1101 = vmatprep.subr.bf16.mxu0 0
      %1102 = vmatpush2.bf16.msra.mxu0 0
      %1103 = vmatprep.mubr.bf16.mxu0 0
      %1104 = vmatmul.mubr.bf16.gmra.mxu0 %v1063
      %v1105 = vpop.f32.mrf.mxu0
      %v1106 = vadd.f32 %v1048, %v1105
      %v1107 = vpop.f32.mrf.mxu0
      %v1108 = vpop.f32.mrf.mxu0
      %v1109 = vadd.f32 %v1051, %v1108
      %v1110 = vpop.f32.mrf.mxu0
      %1111 = vmatprep.mubr.bf16.mxu0 0
      %1112 = vmatmul.mubr.bf16.gmra.mxu0 %v1066
      %v1113 = vpop.f32.mrf.mxu0
      %v1114 = vadd.f32 %v1056, %v1113
      %v1115 = vpop.f32.mrf.mxu0
      %v1116 = vpop.f32.mrf.mxu0
      %v1117 = vadd.f32 %v1059, %v1116
      %v1118 = vpop.f32.mrf.mxu0
      %1119 = vdwg.mxu0
      %s1120 = scalar_lea.vmem %s6, 14
      %v1121 = vld [vmem:[%s1120] sm:$0x3]
      %v1122 = vpack.c.bf16 %v986, %v985
      %v1123 = vpack.c.bf16 %v988, %v987
      %v1125 = vsel %vm1002, %v1122, 0
      %v1128 = vsel %vm1002, %v1123, 0
      %v1131 = vsel %vm1009, %v1121, 0
      %1133 = vmatprep.subr.bf16.mxu0 0
      %1134 = vmatpush1.bf16.msra.mxu0 0
      %1135 = vmatprep.subr.bf16.mxu0 0
      %1136 = vmatpush1.bf16.msra.mxu0 0
      %1137 = vmatprep.subr.bf16.mxu0 0
      %1138 = vmatpush1.bf16.msra.mxu0 0
      %1139 = vmatprep.subr.bf16.mxu0 0
      %1140 = vmatpush1.bf16.msra.mxu0 0
      %1141 = vmatprep.subr.bf16.mxu0 0
      %1142 = vmatpush1.bf16.msra.mxu0 0
      %1143 = vmatprep.subr.bf16.mxu0 0
      %1144 = vmatpush1.bf16.msra.mxu0 0
      %1145 = vmatprep.subr.bf16.mxu0 0
      %1146 = vmatpush1.bf16.msra.mxu0 0
      %1147 = vmatprep.subr.bf16.mxu0 0
      %1148 = vmatpush1.bf16.msra.mxu0 %v1131
      %1149 = vmatprep.subr.bf16.mxu0 0
      %1150 = vmatpush2.bf16.msra.mxu0 0
      %1151 = vmatprep.subr.bf16.mxu0 0
      %1152 = vmatpush2.bf16.msra.mxu0 0
      %1153 = vmatprep.subr.bf16.mxu0 0
      %1154 = vmatpush2.bf16.msra.mxu0 0
      %1155 = vmatprep.subr.bf16.mxu0 0
      %1156 = vmatpush2.bf16.msra.mxu0 0
      %1157 = vmatprep.subr.bf16.mxu0 0
      %1158 = vmatpush2.bf16.msra.mxu0 0
      %1159 = vmatprep.subr.bf16.mxu0 0
      %1160 = vmatpush2.bf16.msra.mxu0 0
      %1161 = vmatprep.subr.bf16.mxu0 0
      %1162 = vmatpush2.bf16.msra.mxu0 0
      %1163 = vmatprep.subr.bf16.mxu0 0
      %1164 = vmatpush2.bf16.msra.mxu0 0
      %1165 = vmatprep.mubr.bf16.mxu0 0
      %1166 = vmatmul.mubr.bf16.gmra.mxu0 %v1125
      %v1167 = vpop.f32.mrf.mxu0
      %v1168 = vadd.f32 0.0, %v1167
      %v1169 = vpop.f32.mrf.mxu0
      %v1170 = vpop.f32.mrf.mxu0
      %v1171 = vadd.f32 0.0, %v1170
      %v1172 = vpop.f32.mrf.mxu0
      %1173 = vmatprep.mubr.bf16.mxu0 0
      %1174 = vmatmul.mubr.bf16.gmra.mxu0 %v1128
      %v1175 = vpop.f32.mrf.mxu0
      %v1176 = vadd.f32 0.0, %v1175
      %v1177 = vpop.f32.mrf.mxu0
      %v1178 = vpop.f32.mrf.mxu0
      %v1179 = vadd.f32 0.0, %v1178
      %v1180 = vpop.f32.mrf.mxu0
      %1181 = vdwg.mxu0
      %v1182 = vadd.f32 %v1106, %v1168
      %v1183 = vadd.f32 %v1109, %v1171
      %v1184 = vadd.f32 %v1114, %v1176
      %v1185 = vadd.f32 %v1117, %v1179
      %s1186 = scalar_lea.vmem %s6, 16
      %v1187 = vld [vmem:[%s1186] sm:$0x3]
      %v1188 = vpack.c.bf16 %v991, %v990
      %v1189 = vpack.c.bf16 %v993, %v992
      %v1191 = vsel %vm1002, %v1188, 0
      %v1194 = vsel %vm1002, %v1189, 0
      %v1197 = vsel %vm1009, %v1187, 0
      %1199 = vmatprep.subr.bf16.mxu0 0
      %1200 = vmatpush1.bf16.msra.mxu0 0
      %1201 = vmatprep.subr.bf16.mxu0 0
      %1202 = vmatpush1.bf16.msra.mxu0 0
      %1203 = vmatprep.subr.bf16.mxu0 0
      %1204 = vmatpush1.bf16.msra.mxu0 0
      %1205 = vmatprep.subr.bf16.mxu0 0
      %1206 = vmatpush1.bf16.msra.mxu0 0
      %1207 = vmatprep.subr.bf16.mxu0 0
      %1208 = vmatpush1.bf16.msra.mxu0 0
      %1209 = vmatprep.subr.bf16.mxu0 0
      %1210 = vmatpush1.bf16.msra.mxu0 0
      %1211 = vmatprep.subr.bf16.mxu0 0
      %1212 = vmatpush1.bf16.msra.mxu0 0
      %1213 = vmatprep.subr.bf16.mxu0 0
      %1214 = vmatpush1.bf16.msra.mxu0 %v1197
      %1215 = vmatprep.subr.bf16.mxu0 0
      %1216 = vmatpush2.bf16.msra.mxu0 0
      %1217 = vmatprep.subr.bf16.mxu0 0
      %1218 = vmatpush2.bf16.msra.mxu0 0
      %1219 = vmatprep.subr.bf16.mxu0 0
      %1220 = vmatpush2.bf16.msra.mxu0 0
      %1221 = vmatprep.subr.bf16.mxu0 0
      %1222 = vmatpush2.bf16.msra.mxu0 0
      %1223 = vmatprep.subr.bf16.mxu0 0
      %1224 = vmatpush2.bf16.msra.mxu0 0
      %1225 = vmatprep.subr.bf16.mxu0 0
      %1226 = vmatpush2.bf16.msra.mxu0 0
      %1227 = vmatprep.subr.bf16.mxu0 0
      %1228 = vmatpush2.bf16.msra.mxu0 0
      %1229 = vmatprep.subr.bf16.mxu0 0
      %1230 = vmatpush2.bf16.msra.mxu0 0
      %1231 = vmatprep.mubr.bf16.mxu0 0
      %1232 = vmatmul.mubr.bf16.gmra.mxu0 %v1191
      %v1233 = vpop.f32.mrf.mxu0
      %v1234 = vadd.f32 0.0, %v1233
      %v1235 = vpop.f32.mrf.mxu0
      %v1236 = vpop.f32.mrf.mxu0
      %v1237 = vadd.f32 0.0, %v1236
      %v1238 = vpop.f32.mrf.mxu0
      %1239 = vmatprep.mubr.bf16.mxu0 0
      %1240 = vmatmul.mubr.bf16.gmra.mxu0 %v1194
      %v1241 = vpop.f32.mrf.mxu0
      %v1242 = vadd.f32 0.0, %v1241
      %v1243 = vpop.f32.mrf.mxu0
      %v1244 = vpop.f32.mrf.mxu0
      %v1245 = vadd.f32 0.0, %v1244
      %v1246 = vpop.f32.mrf.mxu0
      %1247 = vdwg.mxu0
      %v1248 = vadd.f32 %v1182, %v1234
      %v1249 = vadd.f32 %v1183, %v1237
      %v1250 = vadd.f32 %v1184, %v1242
      %v1251 = vadd.f32 %v1185, %v1245
      %s1252 = scalar_lea.vmem %s6, 2
      %v1253 = vld [vmem:[%s1252] sm:$0x3]
      %v1254 = vpack.c.bf16 %v985, %v984
      %v1255 = vpack.c.bf16 %v987, %v986
      %v1257 = vsel %vm1002, %v1254, 0
      %v1260 = vsel %vm1002, %v1255, 0
      %v1263 = vsel %vm1009, %v1253, 0
      %1265 = vmatprep.subr.bf16.mxu0 0
      %1266 = vmatpush1.bf16.msra.mxu0 0
      %1267 = vmatprep.subr.bf16.mxu0 0
      %1268 = vmatpush1.bf16.msra.mxu0 0
      %1269 = vmatprep.subr.bf16.mxu0 0
      %1270 = vmatpush1.bf16.msra.mxu0 0
      %1271 = vmatprep.subr.bf16.mxu0 0
      %1272 = vmatpush1.bf16.msra.mxu0 0
      %1273 = vmatprep.subr.bf16.mxu0 0
      %1274 = vmatpush1.bf16.msra.mxu0 0
      %1275 = vmatprep.subr.bf16.mxu0 0
      %1276 = vmatpush1.bf16.msra.mxu0 0
      %1277 = vmatprep.subr.bf16.mxu0 0
      %1278 = vmatpush1.bf16.msra.mxu0 0
      %1279 = vmatprep.subr.bf16.mxu0 0
      %1280 = vmatpush1.bf16.msra.mxu0 %v1263
      %1281 = vmatprep.subr.bf16.mxu0 0
      %1282 = vmatpush2.bf16.msra.mxu0 0
      %1283 = vmatprep.subr.bf16.mxu0 0
      %1284 = vmatpush2.bf16.msra.mxu0 0
      %1285 = vmatprep.subr.bf16.mxu0 0
      %1286 = vmatpush2.bf16.msra.mxu0 0
      %1287 = vmatprep.subr.bf16.mxu0 0
      %1288 = vmatpush2.bf16.msra.mxu0 0
      %1289 = vmatprep.subr.bf16.mxu0 0
      %1290 = vmatpush2.bf16.msra.mxu0 0
      %1291 = vmatprep.subr.bf16.mxu0 0
      %1292 = vmatpush2.bf16.msra.mxu0 0
      %1293 = vmatprep.subr.bf16.mxu0 0
      %1294 = vmatpush2.bf16.msra.mxu0 0
      %1295 = vmatprep.subr.bf16.mxu0 0
      %1296 = vmatpush2.bf16.msra.mxu0 0
      %1297 = vmatprep.mubr.bf16.mxu0 0
      %1298 = vmatmul.mubr.bf16.gmra.mxu0 %v1257
      %v1299 = vpop.f32.mrf.mxu0
      %v1300 = vadd.f32 0.0, %v1299
      %v1301 = vpop.f32.mrf.mxu0
      %v1302 = vpop.f32.mrf.mxu0
      %v1303 = vadd.f32 0.0, %v1302
      %v1304 = vpop.f32.mrf.mxu0
      %1305 = vmatprep.mubr.bf16.mxu0 0
      %1306 = vmatmul.mubr.bf16.gmra.mxu0 %v1260
      %v1307 = vpop.f32.mrf.mxu0
      %v1308 = vadd.f32 0.0, %v1307
      %v1309 = vpop.f32.mrf.mxu0
      %v1310 = vpop.f32.mrf.mxu0
      %v1311 = vadd.f32 0.0, %v1310
      %v1312 = vpop.f32.mrf.mxu0
      %1313 = vdwg.mxu0
      %v1314 = vadd.f32 %v1248, %v1300
      %v1315 = vadd.f32 %v1249, %v1303
      %v1316 = vadd.f32 %v1250, %v1308
      %v1317 = vadd.f32 %v1251, %v1311
      %s1318 = scalar_lea.vmem %s6, 4
      %v1319 = vld [vmem:[%s1318] sm:$0x3]
      %v1320 = vpack.c.bf16 %v990, %v989
      %v1321 = vpack.c.bf16 %v992, %v991
      %v1323 = vsel %vm1002, %v1320, 0
      %v1326 = vsel %vm1002, %v1321, 0
      %v1329 = vsel %vm1009, %v1319, 0
      %1331 = vmatprep.subr.bf16.mxu0 0
      %1332 = vmatpush1.bf16.msra.mxu0 0
      %1333 = vmatprep.subr.bf16.mxu0 0
      %1334 = vmatpush1.bf16.msra.mxu0 0
      %1335 = vmatprep.subr.bf16.mxu0 0
      %1336 = vmatpush1.bf16.msra.mxu0 0
      %1337 = vmatprep.subr.bf16.mxu0 0
      %1338 = vmatpush1.bf16.msra.mxu0 0
      %1339 = vmatprep.subr.bf16.mxu0 0
      %1340 = vmatpush1.bf16.msra.mxu0 0
      %1341 = vmatprep.subr.bf16.mxu0 0
      %1342 = vmatpush1.bf16.msra.mxu0 0
      %1343 = vmatprep.subr.bf16.mxu0 0
      %1344 = vmatpush1.bf16.msra.mxu0 0
      %1345 = vmatprep.subr.bf16.mxu0 0
      %1346 = vmatpush1.bf16.msra.mxu0 %v1329
      %1347 = vmatprep.subr.bf16.mxu0 0
      %1348 = vmatpush2.bf16.msra.mxu0 0
      %1349 = vmatprep.subr.bf16.mxu0 0
      %1350 = vmatpush2.bf16.msra.mxu0 0
      %1351 = vmatprep.subr.bf16.mxu0 0
      %1352 = vmatpush2.bf16.msra.mxu0 0
      %1353 = vmatprep.subr.bf16.mxu0 0
      %1354 = vmatpush2.bf16.msra.mxu0 0
      %1355 = vmatprep.subr.bf16.mxu0 0
      %1356 = vmatpush2.bf16.msra.mxu0 0
      %1357 = vmatprep.subr.bf16.mxu0 0
      %1358 = vmatpush2.bf16.msra.mxu0 0
      %1359 = vmatprep.subr.bf16.mxu0 0
      %1360 = vmatpush2.bf16.msra.mxu0 0
      %1361 = vmatprep.subr.bf16.mxu0 0
      %1362 = vmatpush2.bf16.msra.mxu0 0
      %1363 = vmatprep.mubr.bf16.mxu0 0
      %1364 = vmatmul.mubr.bf16.gmra.mxu0 %v1323
      %v1365 = vpop.f32.mrf.mxu0
      %v1366 = vadd.f32 0.0, %v1365
      %v1367 = vpop.f32.mrf.mxu0
      %v1368 = vpop.f32.mrf.mxu0
      %v1369 = vadd.f32 0.0, %v1368
      %v1370 = vpop.f32.mrf.mxu0
      %1371 = vmatprep.mubr.bf16.mxu0 0
      %1372 = vmatmul.mubr.bf16.gmra.mxu0 %v1326
      %v1373 = vpop.f32.mrf.mxu0
      %v1374 = vadd.f32 0.0, %v1373
      %v1375 = vpop.f32.mrf.mxu0
      %v1376 = vpop.f32.mrf.mxu0
      %v1377 = vadd.f32 0.0, %v1376
      %v1378 = vpop.f32.mrf.mxu0
      %1379 = vdwg.mxu0
      %v1380 = vadd.f32 %v1314, %v1366
      %v1381 = vadd.f32 %v1315, %v1369
      %v1382 = vadd.f32 %v1316, %v1374
      %v1383 = vadd.f32 %v1317, %v1377
      %s1384 = scalar_lea.vmem %s6, 6
      %v1385 = vld [vmem:[%s1384] sm:$0x3]
      %s1386 = scalar_lea.vmem %s6, 12
      %v1387 = vld [vmem:[%s1386] sm:$0x3]
      %v1389 = vsel %vm1009, %v1387, 0
      %1391 = vmatprep.subr.bf16.mxu0 0
      %1392 = vmatpush1.bf16.msra.mxu0 0
      %1393 = vmatprep.subr.bf16.mxu0 0
      %1394 = vmatpush1.bf16.msra.mxu0 0
      %1395 = vmatprep.subr.bf16.mxu0 0
      %1396 = vmatpush1.bf16.msra.mxu0 0
      %1397 = vmatprep.subr.bf16.mxu0 0
      %1398 = vmatpush1.bf16.msra.mxu0 0
      %1399 = vmatprep.subr.bf16.mxu0 0
      %1400 = vmatpush1.bf16.msra.mxu0 0
      %1401 = vmatprep.subr.bf16.mxu0 0
      %1402 = vmatpush1.bf16.msra.mxu0 0
      %1403 = vmatprep.subr.bf16.mxu0 0
      %1404 = vmatpush1.bf16.msra.mxu0 0
      %1405 = vmatprep.subr.bf16.mxu0 0
      %1406 = vmatpush1.bf16.msra.mxu0 %v1389
      %1407 = vmatprep.subr.bf16.mxu0 0
      %1408 = vmatpush2.bf16.msra.mxu0 0
      %1409 = vmatprep.subr.bf16.mxu0 0
      %1410 = vmatpush2.bf16.msra.mxu0 0
      %1411 = vmatprep.subr.bf16.mxu0 0
      %1412 = vmatpush2.bf16.msra.mxu0 0
      %1413 = vmatprep.subr.bf16.mxu0 0
      %1414 = vmatpush2.bf16.msra.mxu0 0
      %1415 = vmatprep.subr.bf16.mxu0 0
      %1416 = vmatpush2.bf16.msra.mxu0 0
      %1417 = vmatprep.subr.bf16.mxu0 0
      %1418 = vmatpush2.bf16.msra.mxu0 0
      %1419 = vmatprep.subr.bf16.mxu0 0
      %1420 = vmatpush2.bf16.msra.mxu0 0
      %1421 = vmatprep.subr.bf16.mxu0 0
      %1422 = vmatpush2.bf16.msra.mxu0 0
      %1423 = vmatprep.mubr.bf16.mxu0 0
      %1424 = vmatmul.mubr.bf16.gmra.mxu0 %v1191
      %v1425 = vpop.f32.mrf.mxu0
      %v1426 = vadd.f32 0.0, %v1425
      %v1427 = vpop.f32.mrf.mxu0
      %v1428 = vpop.f32.mrf.mxu0
      %v1429 = vadd.f32 0.0, %v1428
      %v1430 = vpop.f32.mrf.mxu0
      %1431 = vmatprep.mubr.bf16.mxu0 0
      %1432 = vmatmul.mubr.bf16.gmra.mxu0 %v1194
      %v1433 = vpop.f32.mrf.mxu0
      %v1434 = vadd.f32 0.0, %v1433
      %v1435 = vpop.f32.mrf.mxu0
      %v1436 = vpop.f32.mrf.mxu0
      %v1437 = vadd.f32 0.0, %v1436
      %v1438 = vpop.f32.mrf.mxu0
      %1439 = vdwg.mxu0
      %v1441 = vsel %vm1009, %v1385, 0
      %1443 = vmatprep.subr.bf16.mxu0 0
      %1444 = vmatpush1.bf16.msra.mxu0 0
      %1445 = vmatprep.subr.bf16.mxu0 0
      %1446 = vmatpush1.bf16.msra.mxu0 0
      %1447 = vmatprep.subr.bf16.mxu0 0
      %1448 = vmatpush1.bf16.msra.mxu0 0
      %1449 = vmatprep.subr.bf16.mxu0 0
      %1450 = vmatpush1.bf16.msra.mxu0 0
      %1451 = vmatprep.subr.bf16.mxu0 0
      %1452 = vmatpush1.bf16.msra.mxu0 0
      %1453 = vmatprep.subr.bf16.mxu0 0
      %1454 = vmatpush1.bf16.msra.mxu0 0
      %1455 = vmatprep.subr.bf16.mxu0 0
      %1456 = vmatpush1.bf16.msra.mxu0 0
      %1457 = vmatprep.subr.bf16.mxu0 0
      %1458 = vmatpush1.bf16.msra.mxu0 %v1441
      %1459 = vmatprep.subr.bf16.mxu0 0
      %1460 = vmatpush2.bf16.msra.mxu0 0
      %1461 = vmatprep.subr.bf16.mxu0 0
      %1462 = vmatpush2.bf16.msra.mxu0 0
      %1463 = vmatprep.subr.bf16.mxu0 0
      %1464 = vmatpush2.bf16.msra.mxu0 0
      %1465 = vmatprep.subr.bf16.mxu0 0
      %1466 = vmatpush2.bf16.msra.mxu0 0
      %1467 = vmatprep.subr.bf16.mxu0 0
      %1468 = vmatpush2.bf16.msra.mxu0 0
      %1469 = vmatprep.subr.bf16.mxu0 0
      %1470 = vmatpush2.bf16.msra.mxu0 0
      %1471 = vmatprep.subr.bf16.mxu0 0
      %1472 = vmatpush2.bf16.msra.mxu0 0
      %1473 = vmatprep.subr.bf16.mxu0 0
      %1474 = vmatpush2.bf16.msra.mxu0 0
      %1475 = vmatprep.mubr.bf16.mxu0 0
      %1476 = vmatmul.mubr.bf16.gmra.mxu0 %v1004
      %v1477 = vpop.f32.mrf.mxu0
      %v1478 = vadd.f32 %v1426, %v1477
      %v1479 = vpop.f32.mrf.mxu0
      %v1480 = vpop.f32.mrf.mxu0
      %v1481 = vadd.f32 %v1429, %v1480
      %v1482 = vpop.f32.mrf.mxu0
      %1483 = vmatprep.mubr.bf16.mxu0 0
      %1484 = vmatmul.mubr.bf16.gmra.mxu0 %v1007
      %v1485 = vpop.f32.mrf.mxu0
      %v1486 = vadd.f32 %v1434, %v1485
      %v1487 = vpop.f32.mrf.mxu0
      %v1488 = vpop.f32.mrf.mxu0
      %v1489 = vadd.f32 %v1437, %v1488
      %v1490 = vpop.f32.mrf.mxu0
      %1491 = vdwg.mxu0
      %v1492 = vld [vmem:[%s6] sm:$0x3]
      %v1494 = vsel %vm1009, %v1492, 0
      %1496 = vmatprep.subr.bf16.mxu0 0
      %1497 = vmatpush1.bf16.msra.mxu0 0
      %1498 = vmatprep.subr.bf16.mxu0 0
      %1499 = vmatpush1.bf16.msra.mxu0 0
      %1500 = vmatprep.subr.bf16.mxu0 0
      %1501 = vmatpush1.bf16.msra.mxu0 0
      %1502 = vmatprep.subr.bf16.mxu0 0
      %1503 = vmatpush1.bf16.msra.mxu0 0
      %1504 = vmatprep.subr.bf16.mxu0 0
      %1505 = vmatpush1.bf16.msra.mxu0 0
      %1506 = vmatprep.subr.bf16.mxu0 0
      %1507 = vmatpush1.bf16.msra.mxu0 0
      %1508 = vmatprep.subr.bf16.mxu0 0
      %1509 = vmatpush1.bf16.msra.mxu0 0
      %1510 = vmatprep.subr.bf16.mxu0 0
      %1511 = vmatpush1.bf16.msra.mxu0 %v1494
      %1512 = vmatprep.subr.bf16.mxu0 0
      %1513 = vmatpush2.bf16.msra.mxu0 0
      %1514 = vmatprep.subr.bf16.mxu0 0
      %1515 = vmatpush2.bf16.msra.mxu0 0
      %1516 = vmatprep.subr.bf16.mxu0 0
      %1517 = vmatpush2.bf16.msra.mxu0 0
      %1518 = vmatprep.subr.bf16.mxu0 0
      %1519 = vmatpush2.bf16.msra.mxu0 0
      %1520 = vmatprep.subr.bf16.mxu0 0
      %1521 = vmatpush2.bf16.msra.mxu0 0
      %1522 = vmatprep.subr.bf16.mxu0 0
      %1523 = vmatpush2.bf16.msra.mxu0 0
      %1524 = vmatprep.subr.bf16.mxu0 0
      %1525 = vmatpush2.bf16.msra.mxu0 0
      %1526 = vmatprep.subr.bf16.mxu0 0
      %1527 = vmatpush2.bf16.msra.mxu0 0
      %1528 = vmatprep.mubr.bf16.mxu0 0
      %1529 = vmatmul.mubr.bf16.gmra.mxu0 %v1323
      %v1530 = vpop.f32.mrf.mxu0
      %v1531 = vadd.f32 0.0, %v1530
      %v1532 = vpop.f32.mrf.mxu0
      %v1533 = vpop.f32.mrf.mxu0
      %v1534 = vadd.f32 0.0, %v1533
      %v1535 = vpop.f32.mrf.mxu0
      %1536 = vmatprep.mubr.bf16.mxu0 0
      %1537 = vmatmul.mubr.bf16.gmra.mxu0 %v1326
      %v1538 = vpop.f32.mrf.mxu0
      %v1539 = vadd.f32 0.0, %v1538
      %v1540 = vpop.f32.mrf.mxu0
      %v1541 = vpop.f32.mrf.mxu0
      %v1542 = vadd.f32 0.0, %v1541
      %v1543 = vpop.f32.mrf.mxu0
      %1544 = vdwg.mxu0
      %v1545 = vadd.f32 %v1478, %v1531
      %v1546 = vadd.f32 %v1481, %v1534
      %v1547 = vadd.f32 %v1486, %v1539
      %v1548 = vadd.f32 %v1489, %v1542
      %vm1553 = vcmask 1040384
      %v1554 = vrot.slane %v1545, 7
      %v1555 = vrot.slane %v1546, 7
      %v1556 = vsel %vm1553, %v1554, %v1555
      %v1557 = vrot.slane %v1547, 7
      %v1558 = vsel %vm1553, %v1555, %v1557
      %v1559 = vrot.slane %v1548, 7
      %v1560 = vsel %vm1553, %v1557, %v1559
      %v1565 = vsel %vm1553, 0.0, %v1554
      %vm1566 = vcmp.lt.s32.totalorder %v966, 0
      %v1567 = vsub.s32 0, %v966
      %v1568 = vsel %vm1566, %v1567, %v966
      %v1569 = vshrl.u32 %v1568, 3
      %v1570 = vand.u32 %v1568, 7
      %v1571 = vsub.s32 0, %v1570
      %v1572 = vsel %vm1566, %v1571, %v1570
      %vm1573 = vcmp.lt.s32.totalorder %v967, 0
      %v1574 = vsub.s32 0, %v967
      %v1575 = vsel %vm1573, %v1574, %v967
      %v1576 = vshrl.u32 %v1575, 3
      %v1577 = vand.u32 %v1575, 7
      %v1578 = vsub.s32 0, %v1577
      %v1579 = vsel %vm1573, %v1578, %v1577
      %vm1580 = vcmp.lt.s32.totalorder %v968, 0
      %v1581 = vsub.s32 0, %v968
      %v1582 = vsel %vm1580, %v1581, %v968
      %v1583 = vshrl.u32 %v1582, 3
      %v1584 = vand.u32 %v1582, 7
      %v1585 = vsub.s32 0, %v1584
      %v1586 = vsel %vm1580, %v1585, %v1584
      %vm1587 = vcmp.lt.s32.totalorder %v969, 0
      %v1588 = vsub.s32 0, %v969
      %v1589 = vsel %vm1587, %v1588, %v969
      %v1590 = vshrl.u32 %v1589, 3
      %v1591 = vand.u32 %v1589, 7
      %v1592 = vsub.s32 0, %v1591
      %v1593 = vsel %vm1587, %v1592, %v1591
      %vm1594 = vcmp.ne.s32.totalorder %v1572, 0
      %vm1595 = vcmp.ne.s32.totalorder %v1579, 0
      %vm1596 = vcmp.ne.s32.totalorder %v1586, 0
      %vm1597 = vcmp.ne.s32.totalorder %v1593, 0
      %vm1598 = vcmp.lt.s32.totalorder %v1572, 0
      %vm1599 = vcmp.lt.s32.totalorder %v1579, 0
      %vm1600 = vcmp.lt.s32.totalorder %v1586, 0
      %vm1601 = vcmp.lt.s32.totalorder %v1593, 0
      %vm1602 = vmand %vm1598, %vm1594
      %vm1603 = vmand %vm1599, %vm1595
      %vm1604 = vmand %vm1600, %vm1596
      %vm1605 = vmand %vm1601, %vm1597
      %v1606 = vadd.s32 %v1572, 8
      %v1607 = vadd.s32 %v1579, 8
      %v1608 = vadd.s32 %v1586, 8
      %v1609 = vadd.s32 %v1593, 8
      %v1610 = vsel %vm1602, %v1606, %v1572
      %v1611 = vsel %vm1603, %v1607, %v1579
      %v1612 = vsel %vm1604, %v1608, %v1586
      %v1613 = vsel %vm1605, %v1609, %v1593
      %vm1614 = vcmp.eq.s32.totalorder %v1610, 0
      %vm1615 = vcmp.eq.s32.totalorder %v1611, 0
      %vm1616 = vcmp.eq.s32.totalorder %v1612, 0
      %vm1617 = vcmp.eq.s32.totalorder %v1613, 0
      %v1618 = vsel %vm1614, 0.0, %v1565
      %v1619 = vsel %vm1615, 0.0, %v1556
      %v1620 = vsel %vm1616, 0.0, %v1558
      %v1621 = vsel %vm1617, 0.0, %v1560
      %v1622 = vadd.f32 %v1380, %v1618
      %v1623 = vadd.f32 %v1381, %v1619
      %v1624 = vadd.f32 %v1382, %v1620
      %v1625 = vadd.f32 %v1383, %v1621
      %v1626 = vld [vmem:[%s7] sm:$0x1]
      %v1628 = vlaneseq
      %v1629 = vshrl.u32 %v1628, 7
      %v1630 = vsub.s32 0, %v1629
      %v1631 = vrot.slane %v1626, %v1630
      %v1633 = vadd.f32 %v1622, %v1631
      %v1634 = vadd.f32 %v1623, %v1631
      %v1635 = vadd.f32 %v1624, %v1631
      %v1636 = vadd.f32 %v1625, %v1631
      %v1637 = vxor.u32 %v1633, 2147483648
      %v1638 = vxor.u32 %v1634, 2147483648
      %v1639 = vxor.u32 %v1635, 2147483648
      %v1640 = vxor.u32 %v1636, 2147483648
      %v1641 = vmul.f32 %v1637, 1.442695
      %v1642 = vpow.pop %v1641
      %v1643 = vmul.f32 %v1638, 1.442695
      %v1644 = vpow.pop %v1643
      %v1645 = vmul.f32 %v1639, 1.442695
      %v1646 = vpow.pop %v1645
      %v1647 = vmul.f32 %v1640, 1.442695
      %v1648 = vpow.pop %v1647
      %v1649 = vadd.f32 %v1642, 1.0
      %v1650 = vadd.f32 %v1644, 1.0
      %v1651 = vadd.f32 %v1646, 1.0
      %v1652 = vadd.f32 %v1648, 1.0
      %v1653 = vrcp.pop %v1649
      %v1654 = vmul.f32 1.0, %v1653
      %v1655 = vrcp.pop %v1650
      %v1656 = vmul.f32 1.0, %v1655
      %v1657 = vrcp.pop %v1651
      %v1658 = vmul.f32 1.0, %v1657
      %v1659 = vrcp.pop %v1652
      %v1660 = vmul.f32 1.0, %v1659
      %v1661 = vmul.f32 %v1633, %v1654
      %v1662 = vmul.f32 %v1634, %v1656
      %v1663 = vmul.f32 %v1635, %v1658
      %v1664 = vmul.f32 %v1636, %v1660
      %1665 = vst.msk [vmem:[%s411] sm:$0xff] %vm1002, %v1661
      %1666 = vst.msk [vmem:[%s411 + $0x8] sm:$0xff] %vm1002, %v1662
      %1667 = vst.msk [vmem:[%s411 + $0x10] sm:$0xff] %vm1002, %v1663
      %1668 = vst.msk [vmem:[%s411 + $0x18] sm:$0xff] %vm1002, %v1664
      %1673 = vrot.lane.b32.xlu0 %v549, 4
      %v1674 = vpop.permute.xlu0 %1673
      %1675 = vrot.lane.b32.xlu0 %v550, 4
      %v1676 = vpop.permute.xlu0 %1675
      %1677 = vrot.lane.b32.xlu0 %v551, 4
      %v1678 = vpop.permute.xlu0 %1677
      %1679 = vrot.lane.b32.xlu0 %v552, 4
      %v1680 = vpop.permute.xlu0 %1679
      %vm1685 = vcmask 64544
      %1686 = vst.msk [vmem:[%s411] sm:$0xff] %vm1685, %v1674
      %1687 = vst.msk [vmem:[%s411 + $0x8] sm:$0xff] %vm1685, %v1676
      %1688 = vst.msk [vmem:[%s411 + $0x10] sm:$0xff] %vm1685, %v1678
      %1689 = vst.msk [vmem:[%s411 + $0x18] sm:$0xff] %vm1685, %v1680
      %s1690 = smul.u32 4, %s24
      %p1691 = scmp.lt.s32.totalorder %s23, 1
      %s1692 = scalar_select %p1691, %s23, 1
      %p1693 = scmp.lt.s32.totalorder %s1690, 7
      %s1694 = scalar_select %p1693, %s1690, 7
      %s1695 = smul.addr %s1692, 8
      %s1696 = sadd.s32 %s1694, %s1695
      %s1697 = smul.addr %s1696, 8
      %s1698 = scalar_lea.vmem %s8, %s1697
      // Predicated region
      $region53: #{_lambda_.1} parent=51 // pred_check
        %p1699 = pneg %p241
      $region54: #{_lambda_.1} parent=51 // pred_check_branch
        %1701 = sbr.rel (%p1699) target = $region56
      $region55: #{_lambda_.1} parent=51 // pred_region
        %s1702 = smul.u32 4, %s24
      $region56: #{_lambda_.1} parent=51 // pred_fallthru
        _
    $region52: #{_lambda_.1} parent=5 // pred_fallthru
      _
    %p1703 = scmp.le.s32.totalorder 2, %s14
    // Predicated region
    $region57: #{_lambda_.1} parent=5 // pred_check
      %p1704 = pneg %p1703
    $region58: #{_lambda_.1} parent=5 // pred_check_branch
      %1706 = sbr.rel (%p1704) target = $region60
    $region59: #{_lambda_.1} parent=5 // pred_region
      %s1707 = ssub.s32 %s14, 2
      // Predicated region
      $region61: #{_lambda_.1} parent=59 // pred_check
        %p1708 = pneg %p247
      $region62: #{_lambda_.1} parent=59 // pred_check_branch
        %1710 = sbr.rel (%p1708) target = $region64
      $region63: #{_lambda_.1} parent=59 // pred_region
        %s1711 = smul.u32 4, %s26
        %p1712 = scmp.lt.s32.totalorder %s25, 1
        %s1713 = scalar_select %p1712, %s25, 1
        %p1714 = scmp.lt.s32.totalorder %s1711, 7
        %s1715 = scalar_select %p1714, %s1711, 7
        %s1716 = smul.addr %s1713, 8
        %s1717 = sadd.s32 %s1715, %s1716
        %s1718 = smul.addr %s1717, 8
        %s1719 = scalar_lea.vmem %s8, %s1718
      $region64: #{_lambda_.1} parent=59 // pred_fallthru
        _
    $region60: #{_lambda_.1} parent=5 // pred_fallthru
      _
  $region6: #{_lambda_.1} parent=0 // loop_footer
    %s18 = sadd.s32 1, %s14
  $region7: #{_lambda_.1} parent=0 // loop_footer_branch
    %13 = sbr.rel target = $region3
  $region8: #{_lambda_.1} parent=0 // loop_exit
    _

</llo_original>
